<compile_context>
chip_gen: v5e
topology: v5e:2x2
jax: 0.10.0
libtpu: 0.0.40
codegen_flags: <defaults>
</compile_context>

<pallas_src>
import functools

import jax
import jax.numpy as jnp
from jax import lax
from jax.experimental import pallas as pl
from jax.experimental.pallas import tpu as pltpu


# --------------------------------------------------------------------------
# Fused Pallas kernel: MLP branch + HopGNN branch + final linear
# --------------------------------------------------------------------------
def _fused_pmlp_hopgnn_kernel(*refs, num_rest, num_hop):
    bf16 = jnp.bfloat16

    # ---- unpack refs (inputs..., output) -------------------------------
    idx = 0
    x_ref = refs[idx]; idx += 1          # (N, IN_C)      bf16
    adj_ref = refs[idx]; idx += 1        # (N, N)         bf16 (normalized adj)
    xw_ref = refs[idx]; idx += 1         # (IN_C, 2H)     bf16  [fc1_w || enc_w]
    b01_ref = refs[idx]; idx += 1        # (1, 2H)        f32   [fc1_b || enc_b]
    if num_rest > 0:
        fcw_ref = refs[idx]; idx += 1    # (num_rest, H, H) bf16
        fcb_ref = refs[idx]; idx += 1    # (num_rest, 1, H) f32
    (watt_ref, wout_ref, bout_ref, fw_ref, fb_ref, o_ref) = refs[idx:]
    # watt: (1, H) f32; wout: (H, H) bf16; bout: (1, H) f32
    # fw:   (2H, out_pad) bf16; fb: (1, out_pad) f32; o: (N, out_pad) f32

    hidden = wout_ref.shape[0]

    x_bf = x_ref[...]                    # bf16, shared LHS of both branches
    adj = adj_ref[...]                   # bf16, loaded once (hoisted)
    watt_row = watt_ref[...]             # (1, H) f32, hoisted out of hop loop

    # ---- fused first layer: [fc1 | encoder] = x @ (IN_C, 2H) -----------
    y01 = jnp.dot(x_bf, xw_ref[...], preferred_element_type=jnp.float32)
    y01 = jnp.maximum(y01 + b01_ref[...], 0.0)        # f32 VPU path
    h = y01[:, :hidden].astype(bf16)                   # MLP branch, layer 1
    h0 = y01[:, hidden:]                                # HopGNN encoder (f32)

    # ---- MLP branch: remaining (Linear + ReLU); dropout = identity -----
    for i in range(num_rest):
        y = jnp.dot(h, fcw_ref[i], preferred_element_type=jnp.float32)
        h = jnp.maximum(y + fcb_ref[i], 0.0).astype(bf16)

    # ---- HopGNN branch: online softmax-attention over hops -------------
    # score on VPU (mul) + XLU (lane reduce): frees the MXU for the adj chain
    s0 = jnp.sum(h0 * watt_row, axis=-1, keepdims=True)      # (N, 1) f32
    m0 = s0
    l0 = jnp.ones_like(s0)
    z0 = h0
    hk0_bf = h0.astype(bf16)

    def hop_body(_, carry):
        hk_bf, m, l, z = carry
        # H_k = A_norm @ H_{k-1}   (MXU, bf16 operands, f32 accumulate)
        hk = jnp.dot(adj, hk_bf, preferred_element_type=jnp.float32)
        s = jnp.sum(hk * watt_row, axis=-1, keepdims=True)    # VPU + XLU
        m_new = jnp.maximum(m, s)
        scale = jnp.exp(m - m_new)
        p = jnp.exp(s - m_new)
        l = scale * l + p
        z = scale * z + p * hk
        return hk.astype(bf16), m_new, l, z                   # single bf16 cast

    _, _, l, z = lax.fori_loop(1, num_hop + 1, hop_body,
                               (hk0_bf, m0, l0, z0), unroll=True)
    z = z * pl.reciprocal(l, approx=True)              # softmax-normalized mix

    # HopGNN readout: hop_out = z @ W_out + b_out
    hop_out = jnp.dot(z.astype(bf16), wout_ref[...],
                      preferred_element_type=jnp.float32)
    hop_out = hop_out + bout_ref[...]                  # (N, H) f32

    # ---- final layer: cat([h, hop_out], -1) @ W_final + b --------------
    hcat = jnp.concatenate([h, hop_out.astype(bf16)], axis=-1)   # (N, 2H) bf16
    out = jnp.dot(hcat, fw_ref[...], preferred_element_type=jnp.float32)
    out = out + fb_ref[...]
    o_ref[...] = out.astype(o_ref.dtype)               # lane-dense store


# --------------------------------------------------------------------------
# Forward builder: packs / casts weights ONCE, returns a jitted forward(x)
# --------------------------------------------------------------------------
def build_forward(params, adj_norm, num_layers, num_hop):
    bf16 = jnp.bfloat16
    n = adj_norm.shape[0]
    in_c = params["fcs"][0][0].shape[0]
    hidden = params["hop_enc_w"].shape[1]
    out_c = params["final_w"].shape[1]
    num_fc = num_layers - 1          # PyTorch forward uses only num_layers-1 fcs
    num_rest = num_fc - 1

    # ---- precomputed, device-resident packed operands -------------------
    # fused [fc1 | encoder] weight / bias
    xw = jnp.concatenate([params["fcs"][0][0], params["hop_enc_w"]],
                         axis=1).astype(bf16)                   # (IN_C, 2H)
    b01 = jnp.concatenate([params["fcs"][0][1], params["hop_enc_b"]]
                          ).reshape(1, 2 * hidden).astype(jnp.float32)

    if num_rest > 0:
        fcw = jnp.stack([params["fcs"][i + 1][0] for i in range(num_rest)]
                        ).astype(bf16)                          # (R, H, H)
        fcb = jnp.stack([params["fcs"][i + 1][1].reshape(1, hidden)
                         for i in range(num_rest)]).astype(jnp.float32)
    else:
        fcw = fcb = None

    watt = params["hop_att_w"].reshape(1, hidden).astype(jnp.float32)
    wout = params["hop_out_w"].astype(bf16)
    bout = params["hop_out_b"].reshape(1, hidden).astype(jnp.float32)

    # final weight / bias padded to a lane-dense multiple of 128 output lanes
    out_pad = max(128, ((out_c + 127) // 128) * 128)
    fw = jnp.zeros((2 * hidden, out_pad), jnp.float32
                   ).at[:, :out_c].set(params["final_w"]).astype(bf16)
    fb = jnp.zeros((1, out_pad), jnp.float32).at[:, :out_c].set(params["final_b"])

    adj_bf = adj_norm.astype(bf16)

    # Advisory cost estimate for XLA scheduling around the custom call.
    flops = (2 * n * in_c * 2 * hidden                       # fused fc1+encoder
             + 2 * n * hidden * hidden * num_rest            # remaining fcs
             + 2 * num_hop * n * n * hidden                  # hop propagation
             + 2 * (num_hop + 1) * n * hidden                # attention scores
             + 2 * n * hidden * hidden                       # hop readout
             + 2 * n * 2 * hidden * out_pad)                 # final linear
    const_bytes = sum(int(a.size) * a.dtype.itemsize
                      for a in [adj_bf, xw, b01, watt, wout, bout, fw, fb]
                      + ([fcw, fcb] if num_rest > 0 else []))
    bytes_accessed = const_bytes + n * in_c * 2 + n * out_pad * 4

    kernel = functools.partial(_fused_pmlp_hopgnn_kernel,
                               num_rest=num_rest, num_hop=num_hop)
    call = pl.pallas_call(
        kernel,
        out_shape=jax.ShapeDtypeStruct((n, out_pad), jnp.float32),
        compiler_params=pltpu.CompilerParams(
            # footprint is tiny; 32 MiB is legal on v5e/v6e/v7x scoped VMEM
            vmem_limit_bytes=32 * 1024 * 1024),
        cost_estimate=pl.CostEstimate(
            flops=int(flops),
            transcendentals=int((num_hop + 1) * n * 2),
            bytes_accessed=int(bytes_accessed)),
    )

    @jax.jit
    def forward(x):
        inputs = [x.astype(bf16), adj_bf, xw, b01]
        if num_rest > 0:
            inputs += [fcw, fcb]
        inputs += [watt, wout, bout, fw, fb]
        out = call(*inputs)
        return out[:, :out_c]

    return forward


# --------------------------------------------------------------------------
# Parameter init (deterministic, Xavier-uniform like the PyTorch module)
# --------------------------------------------------------------------------
def xavier_uniform(key, fan_in, fan_out):
    bound = (6.0 / (fan_in + fan_out)) ** 0.5
    return jax.random.uniform(key, (fan_in, fan_out), jnp.float32, -bound, bound)


def make_params(key, in_channels, hidden, out_channels, num_layers):
    keys = jax.random.split(key, 8 + num_layers)
    params = {}
    # fcs: in->hidden, (num_layers-2) x hidden->hidden, hidden->hidden
    # (last one exists in the PyTorch ModuleList but is unused in forward)
    fcs = []
    dims = [in_channels] + [hidden] * num_layers
    for i in range(num_layers):
        w = xavier_uniform(keys[i], dims[i], dims[i + 1])
        b = jnp.zeros((dims[i + 1],), jnp.float32)
        fcs.append((w, b))
    params["fcs"] = fcs
    # HopGNN params
    params["hop_enc_w"] = xavier_uniform(keys[num_layers + 0], in_channels, hidden)
    params["hop_enc_b"] = jnp.zeros((hidden,), jnp.float32)
    params["hop_att_w"] = xavier_uniform(keys[num_layers + 1], hidden, 1).reshape(-1)
    params["hop_out_w"] = xavier_uniform(keys[num_layers + 2], hidden, hidden)
    params["hop_out_b"] = jnp.zeros((hidden,), jnp.float32)
    # final layer: 2*hidden -> out
    params["final_w"] = xavier_uniform(keys[num_layers + 3], 2 * hidden, out_channels)
    params["final_b"] = jnp.zeros((out_channels,), jnp.float32)
    return params


def normalize_adj(adj):
    """Add self loops and symmetrically normalize: D^-1/2 (A + I) D^-1/2."""
    n = adj.shape[0]
    a = adj + jnp.eye(n, dtype=jnp.float32)
    deg = jnp.sum(a, axis=1)
    d_inv_sqrt = 1.0 / jnp.sqrt(jnp.maximum(deg, 1e-12))
    return a * d_inv_sqrt[:, None] * d_inv_sqrt[None, :]


# --------------------------------------------------------------------------
if __name__ == "__main__":
    N = 64            # num_node
    IN_C = 16
    HIDDEN = 32
    OUT_C = 8
    NUM_LAYERS = 3
    NUM_HOP = 6

    key = jax.random.PRNGKey(0)
    k_x, k_adj, k_params = jax.random.split(key, 3)

    # node features
    x = jax.random.normal(k_x, (N, IN_C), jnp.float32)

    # synthetic symmetric adjacency (dense, as to_dense_adj would produce)
    raw = jax.random.uniform(k_adj, (N, N), jnp.float32)
    adj = (raw + raw.T > 1.7).astype(jnp.float32)
    adj = adj * (1.0 - jnp.eye(N, dtype=jnp.float32))
    adj_norm = normalize_adj(adj)

    params = make_params(k_params, IN_C, HIDDEN, OUT_C, NUM_LAYERS)

    forward = build_forward(params, adj_norm, NUM_LAYERS, NUM_HOP)
    out = forward(x)
    out = jax.block_until_ready(out)
    assert out.shape == (N, OUT_C), out.shape
    assert bool(jnp.all(jnp.isfinite(out)))
    print("KERNEL_OK")
</pallas_src>

<mosaic_0001>
module attributes {stable_mosaic.version = 11 : i64} {
  func.func @_fused_pmlp_hopgnn_kernel(%arg0: memref<64x16xbf16, #tpu.memory_space<vmem>>, %arg1: memref<64x64xbf16, #tpu.memory_space<vmem>>, %arg2: memref<16x64xbf16, #tpu.memory_space<vmem>>, %arg3: memref<1x64xf32, #tpu.memory_space<vmem>>, %arg4: memref<1x32x32xbf16, #tpu.memory_space<vmem>>, %arg5: memref<1x1x32xf32, #tpu.memory_space<vmem>>, %arg6: memref<1x32xf32, #tpu.memory_space<vmem>>, %arg7: memref<32x32xbf16, #tpu.memory_space<vmem>>, %arg8: memref<1x32xf32, #tpu.memory_space<vmem>>, %arg9: memref<64x128xbf16, #tpu.memory_space<vmem>>, %arg10: memref<1x128xf32, #tpu.memory_space<vmem>>, %arg11: memref<64x128xf32, #tpu.memory_space<vmem>>) attributes {dimension_semantics = [], scalar_prefetch = 0 : i64, scratch_operands = 0 : i64, tpu.core_type = #tpu.core_type<tc>} {
    %c0 = arith.constant 0 : index
    %c0_0 = arith.constant 0 : index
    %0 = vector.load %arg0[%c0, %c0_0] : memref<64x16xbf16, #tpu.memory_space<vmem>>, vector<64x16xbf16>
    %c0_1 = arith.constant 0 : index
    %c0_2 = arith.constant 0 : index
    %1 = vector.load %arg1[%c0_1, %c0_2] : memref<64x64xbf16, #tpu.memory_space<vmem>>, vector<64x64xbf16>
    %c0_3 = arith.constant 0 : index
    %c0_4 = arith.constant 0 : index
    %2 = vector.load %arg6[%c0_3, %c0_4] : memref<1x32xf32, #tpu.memory_space<vmem>>, vector<1x32xf32>
    %c0_5 = arith.constant 0 : index
    %c0_6 = arith.constant 0 : index
    %3 = vector.load %arg2[%c0_5, %c0_6] : memref<16x64xbf16, #tpu.memory_space<vmem>>, vector<16x64xbf16>
    %cst = arith.constant dense<0.000000e+00> : vector<64x64xf32>
    %4 = tpu.matmul %0, %3, %cst {dimension_numbers = #tpu.dot_dimension_numbers<[1], [0], [0], [1], [0, 0, 1, 1], [], []>} : vector<64x16xbf16>, vector<16x64xbf16>, vector<64x64xf32> -> vector<64x64xf32>
    %c0_7 = arith.constant 0 : index
    %c0_8 = arith.constant 0 : index
    %5 = vector.load %arg3[%c0_7, %c0_8] : memref<1x64xf32, #tpu.memory_space<vmem>>, vector<1x64xf32>
    %6 = vector.broadcast %5 : vector<1x64xf32> to vector<64x64xf32>
    %7 = arith.addf %4, %6 : vector<64x64xf32>
    %cst_9 = arith.constant 0.000000e+00 : f32
    %8 = vector.broadcast %cst_9 : f32 to vector<64x64xf32>
    %9 = arith.maximumf %7, %8 : vector<64x64xf32>
    %10 = vector.extract_strided_slice %9 {offsets = [0, 0], sizes = [64, 32], strides = [1, 1]} : vector<64x64xf32> to vector<64x32xf32>
    %11 = arith.truncf %10 : vector<64x32xf32> to vector<64x32xbf16>
    %12 = vector.extract_strided_slice %9 {offsets = [0, 32], sizes = [64, 32], strides = [1, 1]} : vector<64x64xf32> to vector<64x32xf32>
    %c0_10 = arith.constant 0 : index
    %c0_11 = arith.constant 0 : index
    %c0_12 = arith.constant 0 : index
    %13 = vector.load %arg4[%c0_10, %c0_11, %c0_12] : memref<1x32x32xbf16, #tpu.memory_space<vmem>>, vector<1x32x32xbf16>
    %14 = vector.shape_cast %13 : vector<1x32x32xbf16> to vector<32x32xbf16>
    %cst_13 = arith.constant dense<0.000000e+00> : vector<64x32xf32>
    %15 = tpu.matmul %11, %14, %cst_13 {dimension_numbers = #tpu.dot_dimension_numbers<[1], [0], [0], [1], [0, 0, 1, 1], [], []>} : vector<64x32xbf16>, vector<32x32xbf16>, vector<64x32xf32> -> vector<64x32xf32>
    %c0_14 = arith.constant 0 : index
    %c0_15 = arith.constant 0 : index
    %c0_16 = arith.constant 0 : index
    %16 = vector.load %arg5[%c0_14, %c0_15, %c0_16] : memref<1x1x32xf32, #tpu.memory_space<vmem>>, vector<1x1x32xf32>
    %17 = vector.shape_cast %16 : vector<1x1x32xf32> to vector<1x32xf32>
    %18 = vector.broadcast %17 : vector<1x32xf32> to vector<64x32xf32>
    %19 = arith.addf %15, %18 : vector<64x32xf32>
    %cst_17 = arith.constant 0.000000e+00 : f32
    %20 = vector.broadcast %cst_17 : f32 to vector<64x32xf32>
    %21 = arith.maximumf %19, %20 : vector<64x32xf32>
    %22 = arith.truncf %21 : vector<64x32xf32> to vector<64x32xbf16>
    %23 = vector.broadcast %2 : vector<1x32xf32> to vector<64x32xf32>
    %24 = arith.mulf %12, %23 : vector<64x32xf32>
    %cst_18 = arith.constant dense<0.000000e+00> : vector<64xf32>
    %25 = vector.multi_reduction <add>, %24, %cst_18 [1] : vector<64x32xf32> to vector<64xf32>
    %26 = vector.shape_cast %25 : vector<64xf32> to vector<64x1xf32>
    %cst_19 = arith.constant 1.000000e+00 : f32
    %27 = vector.broadcast %cst_19 : f32 to vector<64x1xf32>
    %28 = arith.truncf %12 : vector<64x32xf32> to vector<64x32xbf16>
    %c0_i32 = arith.constant 0 : i32
    %cst_20 = arith.constant dense<0.000000e+00> : vector<64x32xf32>
    %29 = tpu.matmul %1, %28, %cst_20 {dimension_numbers = #tpu.dot_dimension_numbers<[1], [0], [0], [1], [0, 0, 1, 1], [], []>} : vector<64x64xbf16>, vector<64x32xbf16>, vector<64x32xf32> -> vector<64x32xf32>
    %30 = vector.broadcast %2 : vector<1x32xf32> to vector<64x32xf32>
    %31 = arith.mulf %29, %30 : vector<64x32xf32>
    %cst_21 = arith.constant dense<0.000000e+00> : vector<64xf32>
    %32 = vector.multi_reduction <add>, %31, %cst_21 [1] : vector<64x32xf32> to vector<64xf32>
    %33 = vector.shape_cast %32 : vector<64xf32> to vector<64x1xf32>
    %34 = arith.maximumf %26, %33 : vector<64x1xf32>
    %35 = arith.subf %26, %34 : vector<64x1xf32>
    %36 = math.exp %35 : vector<64x1xf32>
    %37 = arith.subf %33, %34 : vector<64x1xf32>
    %38 = math.exp %37 : vector<64x1xf32>
    %39 = arith.mulf %36, %27 : vector<64x1xf32>
    %40 = arith.addf %39, %38 : vector<64x1xf32>
    %41 = vector.broadcast %36 : vector<64x1xf32> to vector<64x32xf32>
    %42 = arith.mulf %41, %12 : vector<64x32xf32>
    %43 = vector.broadcast %38 : vector<64x1xf32> to vector<64x32xf32>
    %44 = arith.mulf %43, %29 : vector<64x32xf32>
    %45 = arith.addf %42, %44 : vector<64x32xf32>
    %46 = arith.truncf %29 : vector<64x32xf32> to vector<64x32xbf16>
    %c1_i32 = arith.constant 1 : i32
    %cst_22 = arith.constant dense<0.000000e+00> : vector<64x32xf32>
    %47 = tpu.matmul %1, %46, %cst_22 {dimension_numbers = #tpu.dot_dimension_numbers<[1], [0], [0], [1], [0, 0, 1, 1], [], []>} : vector<64x64xbf16>, vector<64x32xbf16>, vector<64x32xf32> -> vector<64x32xf32>
    %48 = vector.broadcast %2 : vector<1x32xf32> to vector<64x32xf32>
    %49 = arith.mulf %47, %48 : vector<64x32xf32>
    %cst_23 = arith.constant dense<0.000000e+00> : vector<64xf32>
    %50 = vector.multi_reduction <add>, %49, %cst_23 [1] : vector<64x32xf32> to vector<64xf32>
    %51 = vector.shape_cast %50 : vector<64xf32> to vector<64x1xf32>
    %52 = arith.maximumf %34, %51 : vector<64x1xf32>
    %53 = arith.subf %34, %52 : vector<64x1xf32>
    %54 = math.exp %53 : vector<64x1xf32>
    %55 = arith.subf %51, %52 : vector<64x1xf32>
    %56 = math.exp %55 : vector<64x1xf32>
    %57 = arith.mulf %54, %40 : vector<64x1xf32>
    %58 = arith.addf %57, %56 : vector<64x1xf32>
    %59 = vector.broadcast %54 : vector<64x1xf32> to vector<64x32xf32>
    %60 = arith.mulf %59, %45 : vector<64x32xf32>
    %61 = vector.broadcast %56 : vector<64x1xf32> to vector<64x32xf32>
    %62 = arith.mulf %61, %47 : vector<64x32xf32>
    %63 = arith.addf %60, %62 : vector<64x32xf32>
    %64 = arith.truncf %47 : vector<64x32xf32> to vector<64x32xbf16>
    %c2_i32 = arith.constant 2 : i32
    %cst_24 = arith.constant dense<0.000000e+00> : vector<64x32xf32>
    %65 = tpu.matmul %1, %64, %cst_24 {dimension_numbers = #tpu.dot_dimension_numbers<[1], [0], [0], [1], [0, 0, 1, 1], [], []>} : vector<64x64xbf16>, vector<64x32xbf16>, vector<64x32xf32> -> vector<64x32xf32>
    %66 = vector.broadcast %2 : vector<1x32xf32> to vector<64x32xf32>
    %67 = arith.mulf %65, %66 : vector<64x32xf32>
    %cst_25 = arith.constant dense<0.000000e+00> : vector<64xf32>
    %68 = vector.multi_reduction <add>, %67, %cst_25 [1] : vector<64x32xf32> to vector<64xf32>
    %69 = vector.shape_cast %68 : vector<64xf32> to vector<64x1xf32>
    %70 = arith.maximumf %52, %69 : vector<64x1xf32>
    %71 = arith.subf %52, %70 : vector<64x1xf32>
    %72 = math.exp %71 : vector<64x1xf32>
    %73 = arith.subf %69, %70 : vector<64x1xf32>
    %74 = math.exp %73 : vector<64x1xf32>
    %75 = arith.mulf %72, %58 : vector<64x1xf32>
    %76 = arith.addf %75, %74 : vector<64x1xf32>
    %77 = vector.broadcast %72 : vector<64x1xf32> to vector<64x32xf32>
    %78 = arith.mulf %77, %63 : vector<64x32xf32>
    %79 = vector.broadcast %74 : vector<64x1xf32> to vector<64x32xf32>
    %80 = arith.mulf %79, %65 : vector<64x32xf32>
    %81 = arith.addf %78, %80 : vector<64x32xf32>
    %82 = arith.truncf %65 : vector<64x32xf32> to vector<64x32xbf16>
    %c3_i32 = arith.constant 3 : i32
    %cst_26 = arith.constant dense<0.000000e+00> : vector<64x32xf32>
    %83 = tpu.matmul %1, %82, %cst_26 {dimension_numbers = #tpu.dot_dimension_numbers<[1], [0], [0], [1], [0, 0, 1, 1], [], []>} : vector<64x64xbf16>, vector<64x32xbf16>, vector<64x32xf32> -> vector<64x32xf32>
    %84 = vector.broadcast %2 : vector<1x32xf32> to vector<64x32xf32>
    %85 = arith.mulf %83, %84 : vector<64x32xf32>
    %cst_27 = arith.constant dense<0.000000e+00> : vector<64xf32>
    %86 = vector.multi_reduction <add>, %85, %cst_27 [1] : vector<64x32xf32> to vector<64xf32>
    %87 = vector.shape_cast %86 : vector<64xf32> to vector<64x1xf32>
    %88 = arith.maximumf %70, %87 : vector<64x1xf32>
    %89 = arith.subf %70, %88 : vector<64x1xf32>
    %90 = math.exp %89 : vector<64x1xf32>
    %91 = arith.subf %87, %88 : vector<64x1xf32>
    %92 = math.exp %91 : vector<64x1xf32>
    %93 = arith.mulf %90, %76 : vector<64x1xf32>
    %94 = arith.addf %93, %92 : vector<64x1xf32>
    %95 = vector.broadcast %90 : vector<64x1xf32> to vector<64x32xf32>
    %96 = arith.mulf %95, %81 : vector<64x32xf32>
    %97 = vector.broadcast %92 : vector<64x1xf32> to vector<64x32xf32>
    %98 = arith.mulf %97, %83 : vector<64x32xf32>
    %99 = arith.addf %96, %98 : vector<64x32xf32>
    %100 = arith.truncf %83 : vector<64x32xf32> to vector<64x32xbf16>
    %c4_i32 = arith.constant 4 : i32
    %cst_28 = arith.constant dense<0.000000e+00> : vector<64x32xf32>
    %101 = tpu.matmul %1, %100, %cst_28 {dimension_numbers = #tpu.dot_dimension_numbers<[1], [0], [0], [1], [0, 0, 1, 1], [], []>} : vector<64x64xbf16>, vector<64x32xbf16>, vector<64x32xf32> -> vector<64x32xf32>
    %102 = vector.broadcast %2 : vector<1x32xf32> to vector<64x32xf32>
    %103 = arith.mulf %101, %102 : vector<64x32xf32>
    %cst_29 = arith.constant dense<0.000000e+00> : vector<64xf32>
    %104 = vector.multi_reduction <add>, %103, %cst_29 [1] : vector<64x32xf32> to vector<64xf32>
    %105 = vector.shape_cast %104 : vector<64xf32> to vector<64x1xf32>
    %106 = arith.maximumf %88, %105 : vector<64x1xf32>
    %107 = arith.subf %88, %106 : vector<64x1xf32>
    %108 = math.exp %107 : vector<64x1xf32>
    %109 = arith.subf %105, %106 : vector<64x1xf32>
    %110 = math.exp %109 : vector<64x1xf32>
    %111 = arith.mulf %108, %94 : vector<64x1xf32>
    %112 = arith.addf %111, %110 : vector<64x1xf32>
    %113 = vector.broadcast %108 : vector<64x1xf32> to vector<64x32xf32>
    %114 = arith.mulf %113, %99 : vector<64x32xf32>
    %115 = vector.broadcast %110 : vector<64x1xf32> to vector<64x32xf32>
    %116 = arith.mulf %115, %101 : vector<64x32xf32>
    %117 = arith.addf %114, %116 : vector<64x32xf32>
    %118 = arith.truncf %101 : vector<64x32xf32> to vector<64x32xbf16>
    %c5_i32 = arith.constant 5 : i32
    %cst_30 = arith.constant dense<0.000000e+00> : vector<64x32xf32>
    %119 = tpu.matmul %1, %118, %cst_30 {dimension_numbers = #tpu.dot_dimension_numbers<[1], [0], [0], [1], [0, 0, 1, 1], [], []>} : vector<64x64xbf16>, vector<64x32xbf16>, vector<64x32xf32> -> vector<64x32xf32>
    %120 = vector.broadcast %2 : vector<1x32xf32> to vector<64x32xf32>
    %121 = arith.mulf %119, %120 : vector<64x32xf32>
    %cst_31 = arith.constant dense<0.000000e+00> : vector<64xf32>
    %122 = vector.multi_reduction <add>, %121, %cst_31 [1] : vector<64x32xf32> to vector<64xf32>
    %123 = vector.shape_cast %122 : vector<64xf32> to vector<64x1xf32>
    %124 = arith.maximumf %106, %123 : vector<64x1xf32>
    %125 = arith.subf %106, %124 : vector<64x1xf32>
    %126 = math.exp %125 : vector<64x1xf32>
    %127 = arith.subf %123, %124 : vector<64x1xf32>
    %128 = math.exp %127 : vector<64x1xf32>
    %129 = arith.mulf %126, %112 : vector<64x1xf32>
    %130 = arith.addf %129, %128 : vector<64x1xf32>
    %131 = vector.broadcast %126 : vector<64x1xf32> to vector<64x32xf32>
    %132 = arith.mulf %131, %117 : vector<64x32xf32>
    %133 = vector.broadcast %128 : vector<64x1xf32> to vector<64x32xf32>
    %134 = arith.mulf %133, %119 : vector<64x32xf32>
    %135 = arith.addf %132, %134 : vector<64x32xf32>
    %136 = arith.truncf %119 : vector<64x32xf32> to vector<64x32xbf16>
    %137 = tpu.reciprocal %130 {approx = true} : vector<64x1xf32> -> vector<64x1xf32>
    %138 = vector.broadcast %137 : vector<64x1xf32> to vector<64x32xf32>
    %139 = arith.mulf %135, %138 : vector<64x32xf32>
    %140 = arith.truncf %139 : vector<64x32xf32> to vector<64x32xbf16>
    %c0_32 = arith.constant 0 : index
    %c0_33 = arith.constant 0 : index
    %141 = vector.load %arg7[%c0_32, %c0_33] : memref<32x32xbf16, #tpu.memory_space<vmem>>, vector<32x32xbf16>
    %cst_34 = arith.constant dense<0.000000e+00> : vector<64x32xf32>
    %142 = tpu.matmul %140, %141, %cst_34 {dimension_numbers = #tpu.dot_dimension_numbers<[1], [0], [0], [1], [0, 0, 1, 1], [], []>} : vector<64x32xbf16>, vector<32x32xbf16>, vector<64x32xf32> -> vector<64x32xf32>
    %c0_35 = arith.constant 0 : index
    %c0_36 = arith.constant 0 : index
    %143 = vector.load %arg8[%c0_35, %c0_36] : memref<1x32xf32, #tpu.memory_space<vmem>>, vector<1x32xf32>
    %144 = vector.broadcast %143 : vector<1x32xf32> to vector<64x32xf32>
    %145 = arith.addf %142, %144 : vector<64x32xf32>
    %146 = arith.truncf %145 : vector<64x32xf32> to vector<64x32xbf16>
    %147 = tpu.concatenate %22, %146 in 1 : vector<64x32xbf16>, vector<64x32xbf16> -> vector<64x64xbf16>
    %c0_37 = arith.constant 0 : index
    %c0_38 = arith.constant 0 : index
    %148 = vector.load %arg9[%c0_37, %c0_38] : memref<64x128xbf16, #tpu.memory_space<vmem>>, vector<64x128xbf16>
    %cst_39 = arith.constant dense<0.000000e+00> : vector<64x128xf32>
    %149 = tpu.matmul %147, %148, %cst_39 {dimension_numbers = #tpu.dot_dimension_numbers<[1], [0], [0], [1], [0, 0, 1, 1], [], []>} : vector<64x64xbf16>, vector<64x128xbf16>, vector<64x128xf32> -> vector<64x128xf32>
    %c0_40 = arith.constant 0 : index
    %c0_41 = arith.constant 0 : index
    %150 = vector.load %arg10[%c0_40, %c0_41] : memref<1x128xf32, #tpu.memory_space<vmem>>, vector<1x128xf32>
    %151 = vector.broadcast %150 : vector<1x128xf32> to vector<64x128xf32>
    %152 = arith.addf %149, %151 : vector<64x128xf32>
    %c0_42 = arith.constant 0 : index
    %c0_43 = arith.constant 0 : index
    %153 = vector.load %arg11[%c0_42, %c0_43] : memref<64x128xf32, #tpu.memory_space<vmem>>, vector<64x128xf32>
    tpu.vector_store %arg11[%c0_42, %c0_43], %152 {strides = array<i32>} : memref<64x128xf32, #tpu.memory_space<vmem>>, vector<64x128xf32>,
    return
  }
}

</mosaic_0001>

<llo_original>
// kernel: forward.1
$region0: #{forward.1}
  #allocation0 [shape = 'u32[]', space=smem, size = 0x4, offset = 0x4, fixed_abs, tag = 'smem constant byte address 0x4 - core index']
  #allocation1 [shape = 'u32[72,128]{1,0:T(1,128)}', space=vmem, size = 0x9000, scoped, tag = 'internal scratch']
  %s0 = inlined_call_operand.vmem [shape: bf16[64,16], index: 0, kind: input, shape index: {}]
  %s1 = inlined_call_operand.vmem [shape: bf16[64,64], index: 1, kind: input, shape index: {}]
  %s2 = inlined_call_operand.vmem [shape: bf16[16,64], index: 2, kind: input, shape index: {}]
  %s3 = inlined_call_operand.vmem [shape: f32[1,64], index: 3, kind: input, shape index: {}]
  %s4 = inlined_call_operand.hbm [shape: bf16[1,32,32], index: 4, kind: input, shape index: {}]
  %s5 = inlined_call_operand.vmem [shape: f32[1,1,32], index: 5, kind: input, shape index: {}]
  %s6 = inlined_call_operand.vmem [shape: f32[1,32], index: 6, kind: input, shape index: {}]
  %s7 = inlined_call_operand.hbm [shape: bf16[32,32], index: 7, kind: input, shape index: {}]
  %s8 = inlined_call_operand.vmem [shape: f32[1,32], index: 8, kind: input, shape index: {}]
  %s9 = inlined_call_operand.vmem [shape: bf16[64,128], index: 9, kind: input, shape index: {}]
  %s10 = inlined_call_operand.vmem [shape: f32[1,128], index: 10, kind: input, shape index: {}]
  %s11 = inlined_call_operand.vmem [shape: f32[64,128], index: 11, kind: output, shape index: {}]
  %s12 = sld [smem:[#allocation0]]
  $region62: #{forward.1} parent=0
    _
  %s14 = ssub.s32 1, %s12
  %s15 = scalar_select 0, %s14, %s12
  $region1: #{forward.1} parent=0
    #allocation2 [shape = 'u8[8192]{0}', space=vmem, size = 0x2000, scoped, tag = 'input window, operand 4, single buffered']
    #allocation3 [shape = 's32[1]{0}', space=sflag, size = 0x4, scoped, tag = 'scoped memory for forward.1']
    #allocation4 [shape = 'u8[8192]{0}', space=vmem, size = 0x2000, scoped, tag = 'input window, operand 7, single buffered']
    #allocation5 [shape = 's32[1]{0}', space=sflag, size = 0x4, scoped, tag = 'scoped memory for forward.1']
    %16 = vsyncpa [#allocation3], 0
    %17 = vsyncpa [#allocation5], 0
    // Predicated region
    $region2: #{forward.1} parent=1 // pred_check
      _
    $region3: #{forward.1} parent=1 // pred_check_branch
      %19 = sbr.rel (0) target = $region5
    $region4: #{forward.1} parent=1 // pred_region
      _
    $region5: #{forward.1} parent=1 // pred_fallthru
      _
    // Predicated region
    $region6: #{forward.1} parent=1 // pred_check
      _
    $region7: #{forward.1} parent=1 // pred_check_branch
      %21 = sbr.rel (0) target = $region9
    $region8: #{forward.1} parent=1 // pred_region
      _
    $region9: #{forward.1} parent=1 // pred_fallthru
      _
    // Predicated region
    $region10: #{forward.1} parent=1 // pred_check
      _
    $region11: #{forward.1} parent=1 // pred_check_branch
      %23 = sbr.rel (0) target = $region13
    $region12: #{forward.1} parent=1 // pred_region
      _
    $region13: #{forward.1} parent=1 // pred_fallthru
      _
    // Predicated region
    $region14: #{forward.1} parent=1 // pred_check
      _
    $region15: #{forward.1} parent=1 // pred_check_branch
      %25 = sbr.rel (0) target = $region17
    $region16: #{forward.1} parent=1 // pred_region
      _
    $region17: #{forward.1} parent=1 // pred_fallthru
      _
    // Predicated region
    $region18: #{forward.1} parent=1 // pred_check
      _
    $region19: #{forward.1} parent=1 // pred_check_branch
      %27 = sbr.rel (0) target = $region21
    $region20: #{forward.1} parent=1 // pred_region
      %29 = vsyncadd [#allocation3], 0
      %s30 = sshll.u32 %s4, 4
      %s31 = int_to_ptr.hbm [resolvable:$true] %s30
      %s32 = sshll.u32 [#allocation2], 4
      %s33 = int_to_ptr.vmem [resolvable:$true] %s32
      %38 = dma.hbm_to_vmem [thread:$0]  %s31, 256, %s33, [#allocation3], 64, 64, 4
    $region21: #{forward.1} parent=1 // pred_fallthru
      _
    // Predicated region
    $region22: #{forward.1} parent=1 // pred_check
      _
    $region23: #{forward.1} parent=1 // pred_check_branch
      %40 = sbr.rel (0) target = $region25
    $region24: #{forward.1} parent=1 // pred_region
      _
    $region25: #{forward.1} parent=1 // pred_fallthru
      _
    // Predicated region
    $region26: #{forward.1} parent=1 // pred_check
      _
    $region27: #{forward.1} parent=1 // pred_check_branch
      %42 = sbr.rel (0) target = $region29
    $region28: #{forward.1} parent=1 // pred_region
      _
    $region29: #{forward.1} parent=1 // pred_fallthru
      _
    // Predicated region
    $region30: #{forward.1} parent=1 // pred_check
      _
    $region31: #{forward.1} parent=1 // pred_check_branch
      %44 = sbr.rel (0) target = $region33
    $region32: #{forward.1} parent=1 // pred_region
      %46 = vsyncadd [#allocation5], 0
      %s47 = sshll.u32 %s7, 4
      %s48 = int_to_ptr.hbm [resolvable:$true] %s47
      %s49 = sshll.u32 [#allocation4], 4
      %s50 = int_to_ptr.vmem [resolvable:$true] %s49
      %55 = dma.hbm_to_vmem [thread:$0]  %s48, 256, %s50, [#allocation5], 64, 64, 4
    $region33: #{forward.1} parent=1 // pred_fallthru
      _
    // Predicated region
    $region34: #{forward.1} parent=1 // pred_check
      _
    $region35: #{forward.1} parent=1 // pred_check_branch
      %57 = sbr.rel (0) target = $region37
    $region36: #{forward.1} parent=1 // pred_region
      _
    $region37: #{forward.1} parent=1 // pred_fallthru
      _
    // Predicated region
    $region38: #{forward.1} parent=1 // pred_check
      _
    $region39: #{forward.1} parent=1 // pred_check_branch
      %59 = sbr.rel (0) target = $region41
    $region40: #{forward.1} parent=1 // pred_region
      _
    $region41: #{forward.1} parent=1 // pred_fallthru
      _
    // Predicated region
    $region42: #{forward.1} parent=1 // pred_check
      _
    $region43: #{forward.1} parent=1 // pred_check_branch
      %61 = sbr.rel (0) target = $region45
    $region44: #{forward.1} parent=1 // pred_region
      _
    $region45: #{forward.1} parent=1 // pred_fallthru
      _
    // Predicated region
    $region46: #{forward.1} parent=1 // pred_check
      _
    $region47: #{forward.1} parent=1 // pred_check_branch
      %63 = sbr.rel (0) target = $region49
    $region48: #{forward.1} parent=1 // pred_region
      %65 = dma.done [#allocation3], 256
    $region49: #{forward.1} parent=1 // pred_fallthru
      _
    // Predicated region
    $region50: #{forward.1} parent=1 // pred_check
      _
    $region51: #{forward.1} parent=1 // pred_check_branch
      %67 = sbr.rel (0) target = $region53
    $region52: #{forward.1} parent=1 // pred_region
      %69 = dma.done [#allocation5], 256
    $region53: #{forward.1} parent=1 // pred_fallthru
      _
    %v71 = vld [vmem:[%s0] sm:$0xf]
    %v72 = vld [vmem:[%s0 + $0x4] sm:$0xf]
    %v73 = vld [vmem:[%s0 + $0x8] sm:$0xf]
    %v74 = vld [vmem:[%s0 + $0xc] sm:$0xf]
    %v75 = vld [vmem:[%s0 + $0x10] sm:$0xf]
    %v76 = vld [vmem:[%s0 + $0x14] sm:$0xf]
    %v77 = vld [vmem:[%s0 + $0x18] sm:$0xf]
    %v78 = vld [vmem:[%s0 + $0x1c] sm:$0xf]
    %v79 = vld [vmem:[%s1] sm:$0xf]
    %v80 = vld [vmem:[%s1 + $0x4] sm:$0xf]
    %v81 = vld [vmem:[%s1 + $0x8] sm:$0xf]
    %v82 = vld [vmem:[%s1 + $0xc] sm:$0xf]
    %v83 = vld [vmem:[%s1 + $0x10] sm:$0xf]
    %v84 = vld [vmem:[%s1 + $0x14] sm:$0xf]
    %v85 = vld [vmem:[%s1 + $0x18] sm:$0xf]
    %v86 = vld [vmem:[%s1 + $0x1c] sm:$0xf]
    %v87 = vld [vmem:[%s6] sm:$0x1]
    %v88 = vld [vmem:[%s2] sm:$0xf]
    %v89 = vld [vmem:[%s2 + $0x4] sm:$0xf]
    %v90 = vld [vmem:[%s3] sm:$0x1]
    %v92 = vperm.slane %v90, 0
    %v102 = vunpack.c.l.b16 %v71
    %v103 = vunpack.c.l.b16 %v72
    %v104 = vunpack.c.l.b16 %v73
    %v105 = vunpack.c.l.b16 %v74
    %v106 = vunpack.c.l.b16 %v75
    %v107 = vunpack.c.l.b16 %v76
    %v108 = vunpack.c.l.b16 %v77
    %v109 = vunpack.c.l.b16 %v78
    %v110 = vpack.c.b16 %v103, %v102
    %v111 = vpack.c.b16 %v105, %v104
    %v112 = vpack.c.b16 %v107, %v106
    %v113 = vpack.c.b16 %v109, %v108
    %v116 = vunpack.c.l.b16 %v88
    %v117 = vunpack.c.l.b16 %v89
    %v118 = vpack.c.b16 %v117, %v116
    %vm120 = vcmask 130048
    %v122 = vsel %vm120, %v110, 0
    %v125 = vsel %vm120, %v111, 0
    %v128 = vsel %vm120, %v112, 0
    %v131 = vsel %vm120, %v113, 0
    %133 = vmatpush.bf16.msra.mxu0 0
    %134 = vmatpush.bf16.msra.mxu0 0
    %135 = vmatpush.bf16.msra.mxu0 0
    %136 = vmatpush.bf16.msra.mxu0 0
    %137 = vmatpush.bf16.msra.mxu0 0
    %138 = vmatpush.bf16.msra.mxu0 0
    %139 = vmatpush.bf16.msra.mxu0 0
    %140 = vmatpush.bf16.msra.mxu0 %v118
    %141 = vmatmul.bf16.gmra.mxu0 %v122
    %v142 = vpop.f32.mrf.mxu0
    %v143 = vadd.f32 %v92, %v142
    %v144 = vpop.f32.mrf.mxu0
    %v145 = vadd.f32 %v92, %v144
    %146 = vmatmul.bf16.gmra.mxu0 %v125
    %v147 = vpop.f32.mrf.mxu0
    %v148 = vadd.f32 %v92, %v147
    %v149 = vpop.f32.mrf.mxu0
    %v150 = vadd.f32 %v92, %v149
    %151 = vmatmul.bf16.gmra.mxu0 %v128
    %v152 = vpop.f32.mrf.mxu0
    %v153 = vadd.f32 %v92, %v152
    %v154 = vpop.f32.mrf.mxu0
    %v155 = vadd.f32 %v92, %v154
    %156 = vmatmul.bf16.gmra.mxu0 %v131
    %v157 = vpop.f32.mrf.mxu0
    %v158 = vadd.f32 %v92, %v157
    %v159 = vpop.f32.mrf.mxu0
    %v160 = vadd.f32 %v92, %v159
    %161 = vdwg.mxu0
    %v162 = vmax.f32 %v143, 0.0
    %v163 = vmax.f32 %v145, 0.0
    %v164 = vmax.f32 %v148, 0.0
    %v165 = vmax.f32 %v150, 0.0
    %v166 = vmax.f32 %v153, 0.0
    %v167 = vmax.f32 %v155, 0.0
    %v168 = vmax.f32 %v158, 0.0
    %v169 = vmax.f32 %v160, 0.0
    %v170 = vpack.c.bf16 %v163, %v162
    %v171 = vpack.c.bf16 %v165, %v164
    %v172 = vpack.c.bf16 %v167, %v166
    %v173 = vpack.c.bf16 %v169, %v168
    %v174 = vld [vmem:[#allocation2] sm:$0xf]
    %v175 = vld [vmem:[#allocation2 + $0x4] sm:$0xf]
    %v176 = vld [vmem:[#allocation2 + $0x8] sm:$0xf]
    %v177 = vld [vmem:[#allocation2 + $0xc] sm:$0xf]
    %v178 = vld [vmem:[%s5] sm:$0x1]
    %v180 = vperm.slane %v178, 0
    %v186 = vunpack.c.l.b16 %v174
    %v187 = vunpack.c.l.b16 %v175
    %v188 = vunpack.c.l.b16 %v176
    %v189 = vunpack.c.l.b16 %v177
    %v190 = vpack.c.b16 %v187, %v186
    %v191 = vpack.c.b16 %v189, %v188
    %vm194 = vcmask 261120
    %v196 = vsel %vm194, %v170, 0
    %v199 = vsel %vm194, %v171, 0
    %v202 = vsel %vm194, %v172, 0
    %v205 = vsel %vm194, %v173, 0
    %207 = vmatpush.bf16.msra.mxu0 0
    %208 = vmatpush.bf16.msra.mxu0 0
    %209 = vmatpush.bf16.msra.mxu0 0
    %210 = vmatpush.bf16.msra.mxu0 0
    %211 = vmatpush.bf16.msra.mxu0 0
    %212 = vmatpush.bf16.msra.mxu0 0
    %213 = vmatpush.bf16.msra.mxu0 %v191
    %214 = vmatpush.bf16.msra.mxu0 %v190
    %215 = vmatmul.bf16.gmra.mxu0 %v196
    %v216 = vpop.f32.mrf.mxu0
    %v217 = vadd.f32 %v180, %v216
    %v218 = vpop.f32.mrf.mxu0
    %v219 = vadd.f32 %v180, %v218
    %220 = vmatmul.bf16.gmra.mxu0 %v199
    %v221 = vpop.f32.mrf.mxu0
    %v222 = vadd.f32 %v180, %v221
    %v223 = vpop.f32.mrf.mxu0
    %v224 = vadd.f32 %v180, %v223
    %225 = vmatmul.bf16.gmra.mxu0 %v202
    %v226 = vpop.f32.mrf.mxu0
    %v227 = vadd.f32 %v180, %v226
    %v228 = vpop.f32.mrf.mxu0
    %v229 = vadd.f32 %v180, %v228
    %230 = vmatmul.bf16.gmra.mxu0 %v205
    %v231 = vpop.f32.mrf.mxu0
    %v232 = vadd.f32 %v180, %v231
    %v233 = vpop.f32.mrf.mxu0
    %v234 = vadd.f32 %v180, %v233
    %235 = vdwg.mxu0
    %v236 = vmax.f32 %v217, 0.0
    %v237 = vmax.f32 %v219, 0.0
    %v238 = vmax.f32 %v222, 0.0
    %v239 = vmax.f32 %v224, 0.0
    %v240 = vmax.f32 %v227, 0.0
    %v241 = vmax.f32 %v229, 0.0
    %v242 = vmax.f32 %v232, 0.0
    %v243 = vmax.f32 %v234, 0.0
    %v244 = vpack.c.bf16 %v236, %v236
    %v245 = vpack.c.bf16 %v237, %v237
    %v246 = vpack.c.bf16 %v238, %v238
    %v247 = vpack.c.bf16 %v239, %v239
    %v248 = vpack.c.bf16 %v240, %v240
    %v249 = vpack.c.bf16 %v241, %v241
    %v250 = vpack.c.bf16 %v242, %v242
    %v251 = vpack.c.bf16 %v243, %v243
    %v253 = vperm.slane %v87, 0
    %255 = vrot.lane.b32.xlu0 %v253, 32
    %v256 = vpop.permute.xlu0 %255
    %v258 = vmul.f32 %v162, %v256
    %v259 = vmul.f32 %v163, %v256
    %v260 = vmul.f32 %v164, %v256
    %v261 = vmul.f32 %v165, %v256
    %v262 = vmul.f32 %v166, %v256
    %v263 = vmul.f32 %v167, %v256
    %v264 = vmul.f32 %v168, %v256
    %v265 = vmul.f32 %v169, %v256
    %274 = vrot.lane.b32.xlu0 %v258, 96
    %v275 = vpop.permute.xlu0 %274
    %276 = vrot.lane.b32.xlu0 %v259, 96
    %v277 = vpop.permute.xlu0 %276
    %278 = vrot.lane.b32.xlu0 %v260, 96
    %v279 = vpop.permute.xlu0 %278
    %280 = vrot.lane.b32.xlu0 %v261, 96
    %v281 = vpop.permute.xlu0 %280
    %282 = vrot.lane.b32.xlu0 %v262, 96
    %v283 = vpop.permute.xlu0 %282
    %284 = vrot.lane.b32.xlu0 %v263, 96
    %v285 = vpop.permute.xlu0 %284
    %286 = vrot.lane.b32.xlu0 %v264, 96
    %v287 = vpop.permute.xlu0 %286
    %288 = vrot.lane.b32.xlu0 %v265, 96
    %v289 = vpop.permute.xlu0 %288
    %v298 = vsel %vm194, %v275, 0.0
    %299 = vadd.xlane.f32.xlu0 %v298
    %v300 = vpop.xlane.xlu0 %299
    %v301 = vsel %vm194, %v277, 0.0
    %302 = vadd.xlane.f32.xlu0 %v301
    %v303 = vpop.xlane.xlu0 %302
    %v304 = vsel %vm194, %v279, 0.0
    %305 = vadd.xlane.f32.xlu0 %v304
    %v306 = vpop.xlane.xlu0 %305
    %v307 = vsel %vm194, %v281, 0.0
    %308 = vadd.xlane.f32.xlu0 %v307
    %v309 = vpop.xlane.xlu0 %308
    %v310 = vsel %vm194, %v283, 0.0
    %311 = vadd.xlane.f32.xlu0 %v310
    %v312 = vpop.xlane.xlu0 %311
    %v313 = vsel %vm194, %v285, 0.0
    %314 = vadd.xlane.f32.xlu0 %v313
    %v315 = vpop.xlane.xlu0 %314
    %v316 = vsel %vm194, %v287, 0.0
    %317 = vadd.xlane.f32.xlu0 %v316
    %v318 = vpop.xlane.xlu0 %317
    %v319 = vsel %vm194, %v289, 0.0
    %320 = vadd.xlane.f32.xlu0 %v319
    %v321 = vpop.xlane.xlu0 %320
    %v330 = vunpack.c.l.b16 %v79
    %v331 = vunpack.c.l.b16 %v80
    %v332 = vunpack.c.l.b16 %v81
    %v333 = vunpack.c.l.b16 %v82
    %v334 = vunpack.c.l.b16 %v83
    %v335 = vunpack.c.l.b16 %v84
    %v336 = vunpack.c.l.b16 %v85
    %v337 = vunpack.c.l.b16 %v86
    %v338 = vpack.c.b16 %v331, %v330
    %v339 = vpack.c.b16 %v333, %v332
    %v340 = vpack.c.b16 %v335, %v334
    %v341 = vpack.c.b16 %v337, %v336
    %346 = vrot.lane.b32.xlu0 %v170, 96
    %v347 = vpop.permute.xlu0 %346
    %348 = vrot.lane.b32.xlu0 %v171, 96
    %v349 = vpop.permute.xlu0 %348
    %350 = vrot.lane.b32.xlu0 %v172, 96
    %v351 = vpop.permute.xlu0 %350
    %352 = vrot.lane.b32.xlu0 %v173, 96
    %v353 = vpop.permute.xlu0 %352
    %vm358 = vcmask 523264
    %v360 = vsel %vm358, %v338, 0
    %v363 = vsel %vm358, %v339, 0
    %v366 = vsel %vm358, %v340, 0
    %v369 = vsel %vm358, %v341, 0
    %371 = vmatpush.bf16.msra.mxu0 0
    %372 = vmatpush.bf16.msra.mxu0 0
    %373 = vmatpush.bf16.msra.mxu0 0
    %374 = vmatpush.bf16.msra.mxu0 0
    %375 = vmatpush.bf16.msra.mxu0 %v353
    %376 = vmatpush.bf16.msra.mxu0 %v351
    %377 = vmatpush.bf16.msra.mxu0 %v349
    %378 = vmatpush.bf16.msra.mxu0 %v347
    %379 = vmatmul.bf16.gmra.mxu0 %v360
    %v380 = vpop.f32.mrf.mxu0
    %v381 = vadd.f32 0.0, %v380
    %v382 = vpop.f32.mrf.mxu0
    %v383 = vadd.f32 0.0, %v382
    %384 = vmatmul.bf16.gmra.mxu0 %v363
    %v385 = vpop.f32.mrf.mxu0
    %v386 = vadd.f32 0.0, %v385
    %v387 = vpop.f32.mrf.mxu0
    %v388 = vadd.f32 0.0, %v387
    %389 = vmatmul.bf16.gmra.mxu0 %v366
    %v390 = vpop.f32.mrf.mxu0
    %v391 = vadd.f32 0.0, %v390
    %v392 = vpop.f32.mrf.mxu0
    %v393 = vadd.f32 0.0, %v392
    %394 = vmatmul.bf16.gmra.mxu0 %v369
    %v395 = vpop.f32.mrf.mxu0
    %v396 = vadd.f32 0.0, %v395
    %v397 = vpop.f32.mrf.mxu0
    %v398 = vadd.f32 0.0, %v397
    %399 = vdwg.mxu0
    %v400 = vmul.f32 %v381, %v253
    %v401 = vmul.f32 %v383, %v253
    %v402 = vmul.f32 %v386, %v253
    %v403 = vmul.f32 %v388, %v253
    %v404 = vmul.f32 %v391, %v253
    %v405 = vmul.f32 %v393, %v253
    %v406 = vmul.f32 %v396, %v253
    %v407 = vmul.f32 %v398, %v253
    %v408 = vsel %vm194, %v400, 0.0
    %409 = vadd.xlane.f32.xlu0 %v408
    %v410 = vpop.xlane.xlu0 %409
    %v411 = vsel %vm194, %v401, 0.0
    %412 = vadd.xlane.f32.xlu0 %v411
    %v413 = vpop.xlane.xlu0 %412
    %v414 = vsel %vm194, %v402, 0.0
    %415 = vadd.xlane.f32.xlu0 %v414
    %v416 = vpop.xlane.xlu0 %415
    %v417 = vsel %vm194, %v403, 0.0
    %418 = vadd.xlane.f32.xlu0 %v417
    %v419 = vpop.xlane.xlu0 %418
    %v420 = vsel %vm194, %v404, 0.0
    %421 = vadd.xlane.f32.xlu0 %v420
    %v422 = vpop.xlane.xlu0 %421
    %v423 = vsel %vm194, %v405, 0.0
    %424 = vadd.xlane.f32.xlu0 %v423
    %v425 = vpop.xlane.xlu0 %424
    %v426 = vsel %vm194, %v406, 0.0
    %427 = vadd.xlane.f32.xlu0 %v426
    %v428 = vpop.xlane.xlu0 %427
    %v429 = vsel %vm194, %v407, 0.0
    %430 = vadd.xlane.f32.xlu0 %v429
    %v431 = vpop.xlane.xlu0 %430
    %v432 = vmax.f32 %v300, %v410
    %v433 = vmax.f32 %v303, %v413
    %v434 = vmax.f32 %v306, %v416
    %v435 = vmax.f32 %v309, %v419
    %v436 = vmax.f32 %v312, %v422
    %v437 = vmax.f32 %v315, %v425
    %v438 = vmax.f32 %v318, %v428
    %v439 = vmax.f32 %v321, %v431
    %v440 = vsub.f32 %v300, %v432
    %v441 = vsub.f32 %v303, %v433
    %v442 = vsub.f32 %v306, %v434
    %v443 = vsub.f32 %v309, %v435
    %v444 = vsub.f32 %v312, %v436
    %v445 = vsub.f32 %v315, %v437
    %v446 = vsub.f32 %v318, %v438
    %v447 = vsub.f32 %v321, %v439
    %v448 = vmul.f32 %v440, 1.442695
    %v449 = vpow.pop %v448
    %v450 = vmul.f32 %v441, 1.442695
    %v451 = vpow.pop %v450
    %v452 = vmul.f32 %v442, 1.442695
    %v453 = vpow.pop %v452
    %v454 = vmul.f32 %v443, 1.442695
    %v455 = vpow.pop %v454
    %v456 = vmul.f32 %v444, 1.442695
    %v457 = vpow.pop %v456
    %v458 = vmul.f32 %v445, 1.442695
    %v459 = vpow.pop %v458
    %v460 = vmul.f32 %v446, 1.442695
    %v461 = vpow.pop %v460
    %v462 = vmul.f32 %v447, 1.442695
    %v463 = vpow.pop %v462
    %v464 = vsub.f32 %v410, %v432
    %v465 = vsub.f32 %v413, %v433
    %v466 = vsub.f32 %v416, %v434
    %v467 = vsub.f32 %v419, %v435
    %v468 = vsub.f32 %v422, %v436
    %v469 = vsub.f32 %v425, %v437
    %v470 = vsub.f32 %v428, %v438
    %v471 = vsub.f32 %v431, %v439
    %v472 = vmul.f32 %v464, 1.442695
    %v473 = vpow.pop %v472
    %v474 = vmul.f32 %v465, 1.442695
    %v475 = vpow.pop %v474
    %v476 = vmul.f32 %v466, 1.442695
    %v477 = vpow.pop %v476
    %v478 = vmul.f32 %v467, 1.442695
    %v479 = vpow.pop %v478
    %v480 = vmul.f32 %v468, 1.442695
    %v481 = vpow.pop %v480
    %v482 = vmul.f32 %v469, 1.442695
    %v483 = vpow.pop %v482
    %v484 = vmul.f32 %v470, 1.442695
    %v485 = vpow.pop %v484
    %v486 = vmul.f32 %v471, 1.442695
    %v487 = vpow.pop %v486
    %v488 = vadd.f32 %v449, %v473
    %v489 = vadd.f32 %v451, %v475
    %v490 = vadd.f32 %v453, %v477
    %v491 = vadd.f32 %v455, %v479
    %v492 = vadd.f32 %v457, %v481
    %v493 = vadd.f32 %v459, %v483
    %v494 = vadd.f32 %v461, %v485
    %v495 = vadd.f32 %v463, %v487
    %v496 = vmul.f32 %v449, %v162
    %v497 = vmul.f32 %v451, %v163
    %v498 = vmul.f32 %v453, %v164
    %v499 = vmul.f32 %v455, %v165
    %v500 = vmul.f32 %v457, %v166
    %v501 = vmul.f32 %v459, %v167
    %v502 = vmul.f32 %v461, %v168
    %v503 = vmul.f32 %v463, %v169
    %v504 = vmul.f32 %v473, %v381
    %v505 = vmul.f32 %v475, %v383
    %v506 = vmul.f32 %v477, %v386
    %v507 = vmul.f32 %v479, %v388
    %v508 = vmul.f32 %v481, %v391
    %v509 = vmul.f32 %v483, %v393
    %v510 = vmul.f32 %v485, %v396
    %v511 = vmul.f32 %v487, %v398
    %520 = vrot.lane.b32.xlu0 %v504, 32
    %v521 = vpop.permute.xlu0 %520
    %522 = vrot.lane.b32.xlu0 %v505, 32
    %v523 = vpop.permute.xlu0 %522
    %524 = vrot.lane.b32.xlu0 %v506, 32
    %v525 = vpop.permute.xlu0 %524
    %526 = vrot.lane.b32.xlu0 %v507, 32
    %v527 = vpop.permute.xlu0 %526
    %528 = vrot.lane.b32.xlu0 %v508, 32
    %v529 = vpop.permute.xlu0 %528
    %530 = vrot.lane.b32.xlu0 %v509, 32
    %v531 = vpop.permute.xlu0 %530
    %532 = vrot.lane.b32.xlu0 %v510, 32
    %v533 = vpop.permute.xlu0 %532
    %534 = vrot.lane.b32.xlu0 %v511, 32
    %v535 = vpop.permute.xlu0 %534
    %v544 = vadd.f32 %v496, %v521
    %v545 = vadd.f32 %v497, %v523
    %v546 = vadd.f32 %v498, %v525
    %v547 = vadd.f32 %v499, %v527
    %v548 = vadd.f32 %v500, %v529
    %v549 = vadd.f32 %v501, %v531
    %v550 = vadd.f32 %v502, %v533
    %v551 = vadd.f32 %v503, %v535
    %v552 = vpack.c.bf16 %v383, %v381
    %v553 = vpack.c.bf16 %v388, %v386
    %v554 = vpack.c.bf16 %v393, %v391
    %v555 = vpack.c.bf16 %v398, %v396
    %556 = vmatpush.bf16.msra.mxu0 0
    %557 = vmatpush.bf16.msra.mxu0 0
    %558 = vmatpush.bf16.msra.mxu0 0
    %559 = vmatpush.bf16.msra.mxu0 0
    %560 = vmatpush.bf16.msra.mxu0 %v555
    %561 = vmatpush.bf16.msra.mxu0 %v554
    %562 = vmatpush.bf16.msra.mxu0 %v553
    %563 = vmatpush.bf16.msra.mxu0 %v552
    %564 = vmatmul.bf16.gmra.mxu0 %v360
    %v565 = vpop.f32.mrf.mxu0
    %v566 = vadd.f32 0.0, %v565
    %v567 = vpop.f32.mrf.mxu0
    %v568 = vadd.f32 0.0, %v567
    %569 = vmatmul.bf16.gmra.mxu0 %v363
    %v570 = vpop.f32.mrf.mxu0
    %v571 = vadd.f32 0.0, %v570
    %v572 = vpop.f32.mrf.mxu0
    %v573 = vadd.f32 0.0, %v572
    %574 = vmatmul.bf16.gmra.mxu0 %v366
    %v575 = vpop.f32.mrf.mxu0
    %v576 = vadd.f32 0.0, %v575
    %v577 = vpop.f32.mrf.mxu0
    %v578 = vadd.f32 0.0, %v577
    %579 = vmatmul.bf16.gmra.mxu0 %v369
    %v580 = vpop.f32.mrf.mxu0
    %v581 = vadd.f32 0.0, %v580
    %v582 = vpop.f32.mrf.mxu0
    %v583 = vadd.f32 0.0, %v582
    %584 = vdwg.mxu0
    %v585 = vmul.f32 %v566, %v253
    %v586 = vmul.f32 %v568, %v253
    %v587 = vmul.f32 %v571, %v253
    %v588 = vmul.f32 %v573, %v253
    %v589 = vmul.f32 %v576, %v253
    %v590 = vmul.f32 %v578, %v253
    %v591 = vmul.f32 %v581, %v253
    %v592 = vmul.f32 %v583, %v253
    %v593 = vsel %vm194, %v585, 0.0
    %594 = vadd.xlane.f32.xlu0 %v593
    %v595 = vpop.xlane.xlu0 %594
    %v596 = vsel %vm194, %v586, 0.0
    %597 = vadd.xlane.f32.xlu0 %v596
    %v598 = vpop.xlane.xlu0 %597
    %v599 = vsel %vm194, %v587, 0.0
    %600 = vadd.xlane.f32.xlu0 %v599
    %v601 = vpop.xlane.xlu0 %600
    %v602 = vsel %vm194, %v588, 0.0
    %603 = vadd.xlane.f32.xlu0 %v602
    %v604 = vpop.xlane.xlu0 %603
    %v605 = vsel %vm194, %v589, 0.0
    %606 = vadd.xlane.f32.xlu0 %v605
    %v607 = vpop.xlane.xlu0 %606
    %v608 = vsel %vm194, %v590, 0.0
    %609 = vadd.xlane.f32.xlu0 %v608
    %v610 = vpop.xlane.xlu0 %609
    %v611 = vsel %vm194, %v591, 0.0
    %612 = vadd.xlane.f32.xlu0 %v611
    %v613 = vpop.xlane.xlu0 %612
    %v614 = vsel %vm194, %v592, 0.0
    %615 = vadd.xlane.f32.xlu0 %v614
    %v616 = vpop.xlane.xlu0 %615
    %v617 = vmax.f32 %v432, %v595
    %v618 = vmax.f32 %v433, %v598
    %v619 = vmax.f32 %v434, %v601
    %v620 = vmax.f32 %v435, %v604
    %v621 = vmax.f32 %v436, %v607
    %v622 = vmax.f32 %v437, %v610
    %v623 = vmax.f32 %v438, %v613
    %v624 = vmax.f32 %v439, %v616
    %v625 = vsub.f32 %v432, %v617
    %v626 = vsub.f32 %v433, %v618
    %v627 = vsub.f32 %v434, %v619
    %v628 = vsub.f32 %v435, %v620
    %v629 = vsub.f32 %v436, %v621
    %v630 = vsub.f32 %v437, %v622
    %v631 = vsub.f32 %v438, %v623
    %v632 = vsub.f32 %v439, %v624
    %v633 = vmul.f32 %v625, 1.442695
    %v634 = vpow.pop %v633
    %v635 = vmul.f32 %v626, 1.442695
    %v636 = vpow.pop %v635
    %v637 = vmul.f32 %v627, 1.442695
    %v638 = vpow.pop %v637
    %v639 = vmul.f32 %v628, 1.442695
    %v640 = vpow.pop %v639
    %v641 = vmul.f32 %v629, 1.442695
    %v642 = vpow.pop %v641
    %v643 = vmul.f32 %v630, 1.442695
    %v644 = vpow.pop %v643
    %v645 = vmul.f32 %v631, 1.442695
    %v646 = vpow.pop %v645
    %v647 = vmul.f32 %v632, 1.442695
    %v648 = vpow.pop %v647
    %v649 = vsub.f32 %v595, %v617
    %v650 = vsub.f32 %v598, %v618
    %v651 = vsub.f32 %v601, %v619
    %v652 = vsub.f32 %v604, %v620
    %v653 = vsub.f32 %v607, %v621
    %v654 = vsub.f32 %v610, %v622
    %v655 = vsub.f32 %v613, %v623
    %v656 = vsub.f32 %v616, %v624
    %v657 = vmul.f32 %v649, 1.442695
    %v658 = vpow.pop %v657
    %v659 = vmul.f32 %v650, 1.442695
    %v660 = vpow.pop %v659
    %v661 = vmul.f32 %v651, 1.442695
    %v662 = vpow.pop %v661
    %v663 = vmul.f32 %v652, 1.442695
    %v664 = vpow.pop %v663
    %v665 = vmul.f32 %v653, 1.442695
    %v666 = vpow.pop %v665
    %v667 = vmul.f32 %v654, 1.442695
    %v668 = vpow.pop %v667
    %v669 = vmul.f32 %v655, 1.442695
    %v670 = vpow.pop %v669
    %v671 = vmul.f32 %v656, 1.442695
    %v672 = vpow.pop %v671
    %v673 = vmul.f32 %v634, %v488
    %v674 = vmul.f32 %v636, %v489
    %v675 = vmul.f32 %v638, %v490
    %v676 = vmul.f32 %v640, %v491
    %v677 = vmul.f32 %v642, %v492
    %v678 = vmul.f32 %v644, %v493
    %v679 = vmul.f32 %v646, %v494
    %v680 = vmul.f32 %v648, %v495
    %v681 = vadd.f32 %v673, %v658
    %v682 = vadd.f32 %v674, %v660
    %v683 = vadd.f32 %v675, %v662
    %v684 = vadd.f32 %v676, %v664
    %v685 = vadd.f32 %v677, %v666
    %v686 = vadd.f32 %v678, %v668
    %v687 = vadd.f32 %v679, %v670
    %v688 = vadd.f32 %v680, %v672
    %v689 = vmul.f32 %v634, %v544
    %v690 = vmul.f32 %v636, %v545
    %v691 = vmul.f32 %v638, %v546
    %v692 = vmul.f32 %v640, %v547
    %v693 = vmul.f32 %v642, %v548
    %v694 = vmul.f32 %v644, %v549
    %v695 = vmul.f32 %v646, %v550
    %v696 = vmul.f32 %v648, %v551
    %v697 = vmul.f32 %v658, %v566
    %v698 = vmul.f32 %v660, %v568
    %v699 = vmul.f32 %v662, %v571
    %v700 = vmul.f32 %v664, %v573
    %v701 = vmul.f32 %v666, %v576
    %v702 = vmul.f32 %v668, %v578
    %v703 = vmul.f32 %v670, %v581
    %v704 = vmul.f32 %v672, %v583
    %713 = vrot.lane.b32.xlu0 %v697, 32
    %v714 = vpop.permute.xlu0 %713
    %715 = vrot.lane.b32.xlu0 %v698, 32
    %v716 = vpop.permute.xlu0 %715
    %717 = vrot.lane.b32.xlu0 %v699, 32
    %v718 = vpop.permute.xlu0 %717
    %719 = vrot.lane.b32.xlu0 %v700, 32
    %v720 = vpop.permute.xlu0 %719
    %721 = vrot.lane.b32.xlu0 %v701, 32
    %v722 = vpop.permute.xlu0 %721
    %723 = vrot.lane.b32.xlu0 %v702, 32
    %v724 = vpop.permute.xlu0 %723
    %725 = vrot.lane.b32.xlu0 %v703, 32
    %v726 = vpop.permute.xlu0 %725
    %727 = vrot.lane.b32.xlu0 %v704, 32
    %v728 = vpop.permute.xlu0 %727
    %v737 = vadd.f32 %v689, %v714
    %v738 = vadd.f32 %v690, %v716
    %v739 = vadd.f32 %v691, %v718
    %v740 = vadd.f32 %v692, %v720
    %v741 = vadd.f32 %v693, %v722
    %v742 = vadd.f32 %v694, %v724
    %v743 = vadd.f32 %v695, %v726
    %v744 = vadd.f32 %v696, %v728
    %v745 = vpack.c.bf16 %v568, %v566
    %v746 = vpack.c.bf16 %v573, %v571
    %v747 = vpack.c.bf16 %v578, %v576
    %v748 = vpack.c.bf16 %v583, %v581
    %749 = vmatpush.bf16.msra.mxu0 0
    %750 = vmatpush.bf16.msra.mxu0 0
    %751 = vmatpush.bf16.msra.mxu0 0
    %752 = vmatpush.bf16.msra.mxu0 0
    %753 = vmatpush.bf16.msra.mxu0 %v748
    %754 = vmatpush.bf16.msra.mxu0 %v747
    %755 = vmatpush.bf16.msra.mxu0 %v746
    %756 = vmatpush.bf16.msra.mxu0 %v745
    %757 = vmatmul.bf16.gmra.mxu0 %v360
    %v758 = vpop.f32.mrf.mxu0
    %v759 = vadd.f32 0.0, %v758
    %v760 = vpop.f32.mrf.mxu0
    %v761 = vadd.f32 0.0, %v760
    %762 = vmatmul.bf16.gmra.mxu0 %v363
    %v763 = vpop.f32.mrf.mxu0
    %v764 = vadd.f32 0.0, %v763
    %v765 = vpop.f32.mrf.mxu0
    %v766 = vadd.f32 0.0, %v765
    %767 = vmatmul.bf16.gmra.mxu0 %v366
    %v768 = vpop.f32.mrf.mxu0
    %v769 = vadd.f32 0.0, %v768
    %v770 = vpop.f32.mrf.mxu0
    %v771 = vadd.f32 0.0, %v770
    %772 = vmatmul.bf16.gmra.mxu0 %v369
    %v773 = vpop.f32.mrf.mxu0
    %v774 = vadd.f32 0.0, %v773
    %v775 = vpop.f32.mrf.mxu0
    %v776 = vadd.f32 0.0, %v775
    %777 = vdwg.mxu0
    %v778 = vmul.f32 %v759, %v253
    %v779 = vmul.f32 %v761, %v253
    %v780 = vmul.f32 %v764, %v253
    %v781 = vmul.f32 %v766, %v253
    %v782 = vmul.f32 %v769, %v253
    %v783 = vmul.f32 %v771, %v253
    %v784 = vmul.f32 %v774, %v253
    %v785 = vmul.f32 %v776, %v253
    %v786 = vsel %vm194, %v778, 0.0
    %787 = vadd.xlane.f32.xlu0 %v786
    %v788 = vpop.xlane.xlu0 %787
    %v789 = vsel %vm194, %v779, 0.0
    %790 = vadd.xlane.f32.xlu0 %v789
    %v791 = vpop.xlane.xlu0 %790
    %v792 = vsel %vm194, %v780, 0.0
    %793 = vadd.xlane.f32.xlu0 %v792
    %v794 = vpop.xlane.xlu0 %793
    %v795 = vsel %vm194, %v781, 0.0
    %796 = vadd.xlane.f32.xlu0 %v795
    %v797 = vpop.xlane.xlu0 %796
    %v798 = vsel %vm194, %v782, 0.0
    %799 = vadd.xlane.f32.xlu0 %v798
    %v800 = vpop.xlane.xlu0 %799
    %v801 = vsel %vm194, %v783, 0.0
    %802 = vadd.xlane.f32.xlu0 %v801
    %v803 = vpop.xlane.xlu0 %802
    %v804 = vsel %vm194, %v784, 0.0
    %805 = vadd.xlane.f32.xlu0 %v804
    %v806 = vpop.xlane.xlu0 %805
    %v807 = vsel %vm194, %v785, 0.0
    %808 = vadd.xlane.f32.xlu0 %v807
    %v809 = vpop.xlane.xlu0 %808
    %v810 = vmax.f32 %v617, %v788
    %v811 = vmax.f32 %v618, %v791
    %v812 = vmax.f32 %v619, %v794
    %v813 = vmax.f32 %v620, %v797
    %v814 = vmax.f32 %v621, %v800
    %v815 = vmax.f32 %v622, %v803
    %v816 = vmax.f32 %v623, %v806
    %v817 = vmax.f32 %v624, %v809
    %v818 = vsub.f32 %v617, %v810
    %v819 = vsub.f32 %v618, %v811
    %v820 = vsub.f32 %v619, %v812
    %v821 = vsub.f32 %v620, %v813
    %v822 = vsub.f32 %v621, %v814
    %v823 = vsub.f32 %v622, %v815
    %v824 = vsub.f32 %v623, %v816
    %v825 = vsub.f32 %v624, %v817
    %v826 = vmul.f32 %v818, 1.442695
    %v827 = vpow.pop %v826
    %v828 = vmul.f32 %v819, 1.442695
    %v829 = vpow.pop %v828
    %v830 = vmul.f32 %v820, 1.442695
    %v831 = vpow.pop %v830
    %v832 = vmul.f32 %v821, 1.442695
    %v833 = vpow.pop %v832
    %v834 = vmul.f32 %v822, 1.442695
    %v835 = vpow.pop %v834
    %v836 = vmul.f32 %v823, 1.442695
    %v837 = vpow.pop %v836
    %v838 = vmul.f32 %v824, 1.442695
    %v839 = vpow.pop %v838
    %v840 = vmul.f32 %v825, 1.442695
    %v841 = vpow.pop %v840
    %v842 = vsub.f32 %v788, %v810
    %v843 = vsub.f32 %v791, %v811
    %v844 = vsub.f32 %v794, %v812
    %v845 = vsub.f32 %v797, %v813
    %v846 = vsub.f32 %v800, %v814
    %v847 = vsub.f32 %v803, %v815
    %v848 = vsub.f32 %v806, %v816
    %v849 = vsub.f32 %v809, %v817
    %v850 = vmul.f32 %v842, 1.442695
    %v851 = vpow.pop %v850
    %v852 = vmul.f32 %v843, 1.442695
    %v853 = vpow.pop %v852
    %v854 = vmul.f32 %v844, 1.442695
    %v855 = vpow.pop %v854
    %v856 = vmul.f32 %v845, 1.442695
    %v857 = vpow.pop %v856
    %v858 = vmul.f32 %v846, 1.442695
    %v859 = vpow.pop %v858
    %v860 = vmul.f32 %v847, 1.442695
    %v861 = vpow.pop %v860
    %v862 = vmul.f32 %v848, 1.442695
    %v863 = vpow.pop %v862
    %v864 = vmul.f32 %v849, 1.442695
    %v865 = vpow.pop %v864
    %v866 = vmul.f32 %v827, %v681
    %v867 = vmul.f32 %v829, %v682
    %v868 = vmul.f32 %v831, %v683
    %v869 = vmul.f32 %v833, %v684
    %v870 = vmul.f32 %v835, %v685
    %v871 = vmul.f32 %v837, %v686
    %v872 = vmul.f32 %v839, %v687
    %v873 = vmul.f32 %v841, %v688
    %v874 = vadd.f32 %v866, %v851
    %v875 = vadd.f32 %v867, %v853
    %v876 = vadd.f32 %v868, %v855
    %v877 = vadd.f32 %v869, %v857
    %v878 = vadd.f32 %v870, %v859
    %v879 = vadd.f32 %v871, %v861
    %v880 = vadd.f32 %v872, %v863
    %v881 = vadd.f32 %v873, %v865
    %v882 = vmul.f32 %v827, %v737
    %v883 = vmul.f32 %v829, %v738
    %v884 = vmul.f32 %v831, %v739
    %v885 = vmul.f32 %v833, %v740
    %v886 = vmul.f32 %v835, %v741
    %v887 = vmul.f32 %v837, %v742
    %v888 = vmul.f32 %v839, %v743
    %v889 = vmul.f32 %v841, %v744
    %v890 = vmul.f32 %v851, %v759
    %v891 = vmul.f32 %v853, %v761
    %v892 = vmul.f32 %v855, %v764
    %v893 = vmul.f32 %v857, %v766
    %v894 = vmul.f32 %v859, %v769
    %v895 = vmul.f32 %v861, %v771
    %v896 = vmul.f32 %v863, %v774
    %v897 = vmul.f32 %v865, %v776
    %906 = vrot.lane.b32.xlu0 %v890, 32
    %v907 = vpop.permute.xlu0 %906
    %908 = vrot.lane.b32.xlu0 %v891, 32
    %v909 = vpop.permute.xlu0 %908
    %910 = vrot.lane.b32.xlu0 %v892, 32
    %v911 = vpop.permute.xlu0 %910
    %912 = vrot.lane.b32.xlu0 %v893, 32
    %v913 = vpop.permute.xlu0 %912
    %914 = vrot.lane.b32.xlu0 %v894, 32
    %v915 = vpop.permute.xlu0 %914
    %916 = vrot.lane.b32.xlu0 %v895, 32
    %v917 = vpop.permute.xlu0 %916
    %918 = vrot.lane.b32.xlu0 %v896, 32
    %v919 = vpop.permute.xlu0 %918
    %920 = vrot.lane.b32.xlu0 %v897, 32
    %v921 = vpop.permute.xlu0 %920
    %v930 = vadd.f32 %v882, %v907
    %v931 = vadd.f32 %v883, %v909
    %v932 = vadd.f32 %v884, %v911
    %v933 = vadd.f32 %v885, %v913
    %v934 = vadd.f32 %v886, %v915
    %v935 = vadd.f32 %v887, %v917
    %v936 = vadd.f32 %v888, %v919
    %v937 = vadd.f32 %v889, %v921
    %v938 = vpack.c.bf16 %v761, %v759
    %v939 = vpack.c.bf16 %v766, %v764
    %v940 = vpack.c.bf16 %v771, %v769
    %v941 = vpack.c.bf16 %v776, %v774
    %942 = vmatpush.bf16.msra.mxu0 0
    %943 = vmatpush.bf16.msra.mxu0 0
    %944 = vmatpush.bf16.msra.mxu0 0
    %945 = vmatpush.bf16.msra.mxu0 0
    %946 = vmatpush.bf16.msra.mxu0 %v941
    %947 = vmatpush.bf16.msra.mxu0 %v940
    %948 = vmatpush.bf16.msra.mxu0 %v939
    %949 = vmatpush.bf16.msra.mxu0 %v938
    %950 = vmatmul.bf16.gmra.mxu0 %v360
    %v951 = vpop.f32.mrf.mxu0
    %v952 = vadd.f32 0.0, %v951
    %v953 = vpop.f32.mrf.mxu0
    %v954 = vadd.f32 0.0, %v953
    %955 = vmatmul.bf16.gmra.mxu0 %v363
    %v956 = vpop.f32.mrf.mxu0
    %v957 = vadd.f32 0.0, %v956
    %v958 = vpop.f32.mrf.mxu0
    %v959 = vadd.f32 0.0, %v958
    %960 = vmatmul.bf16.gmra.mxu0 %v366
    %v961 = vpop.f32.mrf.mxu0
    %v962 = vadd.f32 0.0, %v961
    %v963 = vpop.f32.mrf.mxu0
    %v964 = vadd.f32 0.0, %v963
    %965 = vmatmul.bf16.gmra.mxu0 %v369
    %v966 = vpop.f32.mrf.mxu0
    %v967 = vadd.f32 0.0, %v966
    %v968 = vpop.f32.mrf.mxu0
    %v969 = vadd.f32 0.0, %v968
    %970 = vdwg.mxu0
    %v971 = vmul.f32 %v952, %v253
    %v972 = vmul.f32 %v954, %v253
    %v973 = vmul.f32 %v957, %v253
    %v974 = vmul.f32 %v959, %v253
    %v975 = vmul.f32 %v962, %v253
    %v976 = vmul.f32 %v964, %v253
    %v977 = vmul.f32 %v967, %v253
    %v978 = vmul.f32 %v969, %v253
    %v979 = vsel %vm194, %v971, 0.0
    %980 = vadd.xlane.f32.xlu0 %v979
    %v981 = vpop.xlane.xlu0 %980
    %v982 = vsel %vm194, %v972, 0.0
    %983 = vadd.xlane.f32.xlu0 %v982
    %v984 = vpop.xlane.xlu0 %983
    %v985 = vsel %vm194, %v973, 0.0
    %986 = vadd.xlane.f32.xlu0 %v985
    %v987 = vpop.xlane.xlu0 %986
    %v988 = vsel %vm194, %v974, 0.0
    %989 = vadd.xlane.f32.xlu0 %v988
    %v990 = vpop.xlane.xlu0 %989
    %v991 = vsel %vm194, %v975, 0.0
    %992 = vadd.xlane.f32.xlu0 %v991
    %v993 = vpop.xlane.xlu0 %992
    %v994 = vsel %vm194, %v976, 0.0
    %995 = vadd.xlane.f32.xlu0 %v994
    %v996 = vpop.xlane.xlu0 %995
    %v997 = vsel %vm194, %v977, 0.0
    %998 = vadd.xlane.f32.xlu0 %v997
    %v999 = vpop.xlane.xlu0 %998
    %v1000 = vsel %vm194, %v978, 0.0
    %1001 = vadd.xlane.f32.xlu0 %v1000
    %v1002 = vpop.xlane.xlu0 %1001
    %v1003 = vmax.f32 %v810, %v981
    %v1004 = vmax.f32 %v811, %v984
    %v1005 = vmax.f32 %v812, %v987
    %v1006 = vmax.f32 %v813, %v990
    %v1007 = vmax.f32 %v814, %v993
    %v1008 = vmax.f32 %v815, %v996
    %v1009 = vmax.f32 %v816, %v999
    %v1010 = vmax.f32 %v817, %v1002
    %v1011 = vsub.f32 %v810, %v1003
    %v1012 = vsub.f32 %v811, %v1004
    %v1013 = vsub.f32 %v812, %v1005
    %v1014 = vsub.f32 %v813, %v1006
    %v1015 = vsub.f32 %v814, %v1007
    %v1016 = vsub.f32 %v815, %v1008
    %v1017 = vsub.f32 %v816, %v1009
    %v1018 = vsub.f32 %v817, %v1010
    %v1019 = vmul.f32 %v1011, 1.442695
    %v1020 = vpow.pop %v1019
    %v1021 = vmul.f32 %v1012, 1.442695
    %v1022 = vpow.pop %v1021
    %v1023 = vmul.f32 %v1013, 1.442695
    %v1024 = vpow.pop %v1023
    %v1025 = vmul.f32 %v1014, 1.442695
    %v1026 = vpow.pop %v1025
    %v1027 = vmul.f32 %v1015, 1.442695
    %v1028 = vpow.pop %v1027
    %v1029 = vmul.f32 %v1016, 1.442695
    %v1030 = vpow.pop %v1029
    %v1031 = vmul.f32 %v1017, 1.442695
    %v1032 = vpow.pop %v1031
    %v1033 = vmul.f32 %v1018, 1.442695
    %v1034 = vpow.pop %v1033
    %v1035 = vsub.f32 %v981, %v1003
    %v1036 = vsub.f32 %v984, %v1004
    %v1037 = vsub.f32 %v987, %v1005
    %v1038 = vsub.f32 %v990, %v1006
    %v1039 = vsub.f32 %v993, %v1007
    %v1040 = vsub.f32 %v996, %v1008
    %v1041 = vsub.f32 %v999, %v1009
    %v1042 = vsub.f32 %v1002, %v1010
    %v1043 = vmul.f32 %v1035, 1.442695
    %v1044 = vpow.pop %v1043
    %v1045 = vmul.f32 %v1036, 1.442695
    %v1046 = vpow.pop %v1045
    %v1047 = vmul.f32 %v1037, 1.442695
    %v1048 = vpow.pop %v1047
    %v1049 = vmul.f32 %v1038, 1.442695
    %v1050 = vpow.pop %v1049
    %v1051 = vmul.f32 %v1039, 1.442695
    %v1052 = vpow.pop %v1051
    %v1053 = vmul.f32 %v1040, 1.442695
    %v1054 = vpow.pop %v1053
    %v1055 = vmul.f32 %v1041, 1.442695
    %v1056 = vpow.pop %v1055
    %v1057 = vmul.f32 %v1042, 1.442695
    %v1058 = vpow.pop %v1057
    %v1059 = vmul.f32 %v1020, %v874
    %v1060 = vmul.f32 %v1022, %v875
    %v1061 = vmul.f32 %v1024, %v876
    %v1062 = vmul.f32 %v1026, %v877
    %v1063 = vmul.f32 %v1028, %v878
    %v1064 = vmul.f32 %v1030, %v879
    %v1065 = vmul.f32 %v1032, %v880
    %v1066 = vmul.f32 %v1034, %v881
    %v1067 = vadd.f32 %v1059, %v1044
    %v1068 = vadd.f32 %v1060, %v1046
    %v1069 = vadd.f32 %v1061, %v1048
    %v1070 = vadd.f32 %v1062, %v1050
    %v1071 = vadd.f32 %v1063, %v1052
    %v1072 = vadd.f32 %v1064, %v1054
    %v1073 = vadd.f32 %v1065, %v1056
    %v1074 = vadd.f32 %v1066, %v1058
    %v1075 = vmul.f32 %v1020, %v930
    %v1076 = vmul.f32 %v1022, %v931
    %v1077 = vmul.f32 %v1024, %v932
    %v1078 = vmul.f32 %v1026, %v933
    %v1079 = vmul.f32 %v1028, %v934
    %v1080 = vmul.f32 %v1030, %v935
    %v1081 = vmul.f32 %v1032, %v936
    %v1082 = vmul.f32 %v1034, %v937
    %v1083 = vmul.f32 %v1044, %v952
    %v1084 = vmul.f32 %v1046, %v954
    %v1085 = vmul.f32 %v1048, %v957
    %v1086 = vmul.f32 %v1050, %v959
    %v1087 = vmul.f32 %v1052, %v962
    %v1088 = vmul.f32 %v1054, %v964
    %v1089 = vmul.f32 %v1056, %v967
    %v1090 = vmul.f32 %v1058, %v969
    %1099 = vrot.lane.b32.xlu0 %v1083, 32
    %v1100 = vpop.permute.xlu0 %1099
    %1101 = vrot.lane.b32.xlu0 %v1084, 32
    %v1102 = vpop.permute.xlu0 %1101
    %1103 = vrot.lane.b32.xlu0 %v1085, 32
    %v1104 = vpop.permute.xlu0 %1103
    %1105 = vrot.lane.b32.xlu0 %v1086, 32
    %v1106 = vpop.permute.xlu0 %1105
    %1107 = vrot.lane.b32.xlu0 %v1087, 32
    %v1108 = vpop.permute.xlu0 %1107
    %1109 = vrot.lane.b32.xlu0 %v1088, 32
    %v1110 = vpop.permute.xlu0 %1109
    %1111 = vrot.lane.b32.xlu0 %v1089, 32
    %v1112 = vpop.permute.xlu0 %1111
    %1113 = vrot.lane.b32.xlu0 %v1090, 32
    %v1114 = vpop.permute.xlu0 %1113
    %v1123 = vadd.f32 %v1075, %v1100
    %v1124 = vadd.f32 %v1076, %v1102
    %v1125 = vadd.f32 %v1077, %v1104
    %v1126 = vadd.f32 %v1078, %v1106
    %v1127 = vadd.f32 %v1079, %v1108
    %v1128 = vadd.f32 %v1080, %v1110
    %v1129 = vadd.f32 %v1081, %v1112
    %v1130 = vadd.f32 %v1082, %v1114
    %v1131 = vpack.c.bf16 %v954, %v952
    %v1132 = vpack.c.bf16 %v959, %v957
    %v1133 = vpack.c.bf16 %v964, %v962
    %v1134 = vpack.c.bf16 %v969, %v967
    %1135 = vmatpush.bf16.msra.mxu0 0
    %1136 = vmatpush.bf16.msra.mxu0 0
    %1137 = vmatpush.bf16.msra.mxu0 0
    %1138 = vmatpush.bf16.msra.mxu0 0
    %1139 = vmatpush.bf16.msra.mxu0 %v1134
    %1140 = vmatpush.bf16.msra.mxu0 %v1133
    %1141 = vmatpush.bf16.msra.mxu0 %v1132
    %1142 = vmatpush.bf16.msra.mxu0 %v1131
    %1143 = vmatmul.bf16.gmra.mxu0 %v360
    %v1144 = vpop.f32.mrf.mxu0
    %v1145 = vadd.f32 0.0, %v1144
    %v1146 = vpop.f32.mrf.mxu0
    %v1147 = vadd.f32 0.0, %v1146
    %1148 = vmatmul.bf16.gmra.mxu0 %v363
    %v1149 = vpop.f32.mrf.mxu0
    %v1150 = vadd.f32 0.0, %v1149
    %v1151 = vpop.f32.mrf.mxu0
    %v1152 = vadd.f32 0.0, %v1151
    %1153 = vmatmul.bf16.gmra.mxu0 %v366
    %v1154 = vpop.f32.mrf.mxu0
    %v1155 = vadd.f32 0.0, %v1154
    %v1156 = vpop.f32.mrf.mxu0
    %v1157 = vadd.f32 0.0, %v1156
    %1158 = vmatmul.bf16.gmra.mxu0 %v369
    %v1159 = vpop.f32.mrf.mxu0
    %v1160 = vadd.f32 0.0, %v1159
    %v1161 = vpop.f32.mrf.mxu0
    %v1162 = vadd.f32 0.0, %v1161
    %1163 = vdwg.mxu0
    %v1164 = vmul.f32 %v1145, %v253
    %v1165 = vmul.f32 %v1147, %v253
    %v1166 = vmul.f32 %v1150, %v253
    %v1167 = vmul.f32 %v1152, %v253
    %v1168 = vmul.f32 %v1155, %v253
    %v1169 = vmul.f32 %v1157, %v253
    %v1170 = vmul.f32 %v1160, %v253
    %v1171 = vmul.f32 %v1162, %v253
    %v1172 = vsel %vm194, %v1164, 0.0
    %1173 = vadd.xlane.f32.xlu0 %v1172
    %v1174 = vpop.xlane.xlu0 %1173
    %v1175 = vsel %vm194, %v1165, 0.0
    %1176 = vadd.xlane.f32.xlu0 %v1175
    %v1177 = vpop.xlane.xlu0 %1176
    %v1178 = vsel %vm194, %v1166, 0.0
    %1179 = vadd.xlane.f32.xlu0 %v1178
    %v1180 = vpop.xlane.xlu0 %1179
    %v1181 = vsel %vm194, %v1167, 0.0
    %1182 = vadd.xlane.f32.xlu0 %v1181
    %v1183 = vpop.xlane.xlu0 %1182
    %v1184 = vsel %vm194, %v1168, 0.0
    %1185 = vadd.xlane.f32.xlu0 %v1184
    %v1186 = vpop.xlane.xlu0 %1185
    %v1187 = vsel %vm194, %v1169, 0.0
    %1188 = vadd.xlane.f32.xlu0 %v1187
    %v1189 = vpop.xlane.xlu0 %1188
    %v1190 = vsel %vm194, %v1170, 0.0
    %1191 = vadd.xlane.f32.xlu0 %v1190
    %v1192 = vpop.xlane.xlu0 %1191
    %v1193 = vsel %vm194, %v1171, 0.0
    %1194 = vadd.xlane.f32.xlu0 %v1193
    %v1195 = vpop.xlane.xlu0 %1194
    %v1196 = vmax.f32 %v1003, %v1174
    %v1197 = vmax.f32 %v1004, %v1177
    %v1198 = vmax.f32 %v1005, %v1180
    %v1199 = vmax.f32 %v1006, %v1183
    %v1200 = vmax.f32 %v1007, %v1186
    %v1201 = vmax.f32 %v1008, %v1189
    %v1202 = vmax.f32 %v1009, %v1192
    %v1203 = vmax.f32 %v1010, %v1195
    %v1204 = vsub.f32 %v1003, %v1196
    %v1205 = vsub.f32 %v1004, %v1197
    %v1206 = vsub.f32 %v1005, %v1198
    %v1207 = vsub.f32 %v1006, %v1199
    %v1208 = vsub.f32 %v1007, %v1200
    %v1209 = vsub.f32 %v1008, %v1201
    %v1210 = vsub.f32 %v1009, %v1202
    %v1211 = vsub.f32 %v1010, %v1203
    %v1212 = vmul.f32 %v1204, 1.442695
    %v1213 = vpow.pop %v1212
    %v1214 = vmul.f32 %v1205, 1.442695
    %v1215 = vpow.pop %v1214
    %v1216 = vmul.f32 %v1206, 1.442695
    %v1217 = vpow.pop %v1216
    %v1218 = vmul.f32 %v1207, 1.442695
    %v1219 = vpow.pop %v1218
    %v1220 = vmul.f32 %v1208, 1.442695
    %v1221 = vpow.pop %v1220
    %v1222 = vmul.f32 %v1209, 1.442695
    %v1223 = vpow.pop %v1222
    %v1224 = vmul.f32 %v1210, 1.442695
    %v1225 = vpow.pop %v1224
    %v1226 = vmul.f32 %v1211, 1.442695
    %v1227 = vpow.pop %v1226
    %v1228 = vsub.f32 %v1174, %v1196
    %v1229 = vsub.f32 %v1177, %v1197
    %v1230 = vsub.f32 %v1180, %v1198
    %v1231 = vsub.f32 %v1183, %v1199
    %v1232 = vsub.f32 %v1186, %v1200
    %v1233 = vsub.f32 %v1189, %v1201
    %v1234 = vsub.f32 %v1192, %v1202
    %v1235 = vsub.f32 %v1195, %v1203
    %v1236 = vmul.f32 %v1228, 1.442695
    %v1237 = vpow.pop %v1236
    %v1238 = vmul.f32 %v1229, 1.442695
    %v1239 = vpow.pop %v1238
    %v1240 = vmul.f32 %v1230, 1.442695
    %v1241 = vpow.pop %v1240
    %v1242 = vmul.f32 %v1231, 1.442695
    %v1243 = vpow.pop %v1242
    %v1244 = vmul.f32 %v1232, 1.442695
    %v1245 = vpow.pop %v1244
    %v1246 = vmul.f32 %v1233, 1.442695
    %v1247 = vpow.pop %v1246
    %v1248 = vmul.f32 %v1234, 1.442695
    %v1249 = vpow.pop %v1248
    %v1250 = vmul.f32 %v1235, 1.442695
    %v1251 = vpow.pop %v1250
    %v1252 = vmul.f32 %v1213, %v1067
    %v1253 = vmul.f32 %v1215, %v1068
    %v1254 = vmul.f32 %v1217, %v1069
    %v1255 = vmul.f32 %v1219, %v1070
    %v1256 = vmul.f32 %v1221, %v1071
    %v1257 = vmul.f32 %v1223, %v1072
    %v1258 = vmul.f32 %v1225, %v1073
    %v1259 = vmul.f32 %v1227, %v1074
    %v1260 = vadd.f32 %v1252, %v1237
    %v1261 = vadd.f32 %v1253, %v1239
    %v1262 = vadd.f32 %v1254, %v1241
    %v1263 = vadd.f32 %v1255, %v1243
    %v1264 = vadd.f32 %v1256, %v1245
    %v1265 = vadd.f32 %v1257, %v1247
    %v1266 = vadd.f32 %v1258, %v1249
    %v1267 = vadd.f32 %v1259, %v1251
    %v1268 = vmul.f32 %v1213, %v1123
    %v1269 = vmul.f32 %v1215, %v1124
    %v1270 = vmul.f32 %v1217, %v1125
    %v1271 = vmul.f32 %v1219, %v1126
    %v1272 = vmul.f32 %v1221, %v1127
    %v1273 = vmul.f32 %v1223, %v1128
    %v1274 = vmul.f32 %v1225, %v1129
    %v1275 = vmul.f32 %v1227, %v1130
    %v1276 = vmul.f32 %v1237, %v1145
    %v1277 = vmul.f32 %v1239, %v1147
    %v1278 = vmul.f32 %v1241, %v1150
    %v1279 = vmul.f32 %v1243, %v1152
    %v1280 = vmul.f32 %v1245, %v1155
    %v1281 = vmul.f32 %v1247, %v1157
    %v1282 = vmul.f32 %v1249, %v1160
    %v1283 = vmul.f32 %v1251, %v1162
    %1292 = vrot.lane.b32.xlu0 %v1276, 32
    %v1293 = vpop.permute.xlu0 %1292
    %1294 = vrot.lane.b32.xlu0 %v1277, 32
    %v1295 = vpop.permute.xlu0 %1294
    %1296 = vrot.lane.b32.xlu0 %v1278, 32
    %v1297 = vpop.permute.xlu0 %1296
    %1298 = vrot.lane.b32.xlu0 %v1279, 32
    %v1299 = vpop.permute.xlu0 %1298
    %1300 = vrot.lane.b32.xlu0 %v1280, 32
    %v1301 = vpop.permute.xlu0 %1300
    %1302 = vrot.lane.b32.xlu0 %v1281, 32
    %v1303 = vpop.permute.xlu0 %1302
    %1304 = vrot.lane.b32.xlu0 %v1282, 32
    %v1305 = vpop.permute.xlu0 %1304
    %1306 = vrot.lane.b32.xlu0 %v1283, 32
    %v1307 = vpop.permute.xlu0 %1306
    %v1316 = vadd.f32 %v1268, %v1293
    %v1317 = vadd.f32 %v1269, %v1295
    %v1318 = vadd.f32 %v1270, %v1297
    %v1319 = vadd.f32 %v1271, %v1299
    %v1320 = vadd.f32 %v1272, %v1301
    %v1321 = vadd.f32 %v1273, %v1303
    %v1322 = vadd.f32 %v1274, %v1305
    %v1323 = vadd.f32 %v1275, %v1307
    %v1324 = vpack.c.bf16 %v1147, %v1145
    %v1325 = vpack.c.bf16 %v1152, %v1150
    %v1326 = vpack.c.bf16 %v1157, %v1155
    %v1327 = vpack.c.bf16 %v1162, %v1160
    %1328 = vmatpush.bf16.msra.mxu0 0
    %1329 = vmatpush.bf16.msra.mxu0 0
    %1330 = vmatpush.bf16.msra.mxu0 0
    %1331 = vmatpush.bf16.msra.mxu0 0
    %1332 = vmatpush.bf16.msra.mxu0 %v1327
    %1333 = vmatpush.bf16.msra.mxu0 %v1326
    %1334 = vmatpush.bf16.msra.mxu0 %v1325
    %1335 = vmatpush.bf16.msra.mxu0 %v1324
    %1336 = vmatmul.bf16.gmra.mxu0 %v360
    %v1337 = vpop.f32.mrf.mxu0
    %v1338 = vadd.f32 0.0, %v1337
    %v1339 = vpop.f32.mrf.mxu0
    %v1340 = vadd.f32 0.0, %v1339
    %1341 = vmatmul.bf16.gmra.mxu0 %v363
    %v1342 = vpop.f32.mrf.mxu0
    %v1343 = vadd.f32 0.0, %v1342
    %v1344 = vpop.f32.mrf.mxu0
    %v1345 = vadd.f32 0.0, %v1344
    %1346 = vmatmul.bf16.gmra.mxu0 %v366
    %v1347 = vpop.f32.mrf.mxu0
    %v1348 = vadd.f32 0.0, %v1347
    %v1349 = vpop.f32.mrf.mxu0
    %v1350 = vadd.f32 0.0, %v1349
    %1351 = vmatmul.bf16.gmra.mxu0 %v369
    %v1352 = vpop.f32.mrf.mxu0
    %v1353 = vadd.f32 0.0, %v1352
    %v1354 = vpop.f32.mrf.mxu0
    %v1355 = vadd.f32 0.0, %v1354
    %1356 = vdwg.mxu0
    %v1357 = vmul.f32 %v1338, %v253
    %v1358 = vmul.f32 %v1340, %v253
    %v1359 = vmul.f32 %v1343, %v253
    %v1360 = vmul.f32 %v1345, %v253
    %v1361 = vmul.f32 %v1348, %v253
    %v1362 = vmul.f32 %v1350, %v253
    %v1363 = vmul.f32 %v1353, %v253
    %v1364 = vmul.f32 %v1355, %v253
    %v1365 = vsel %vm194, %v1357, 0.0
    %1366 = vadd.xlane.f32.xlu0 %v1365
    %v1367 = vpop.xlane.xlu0 %1366
    %v1368 = vsel %vm194, %v1358, 0.0
    %1369 = vadd.xlane.f32.xlu0 %v1368
    %v1370 = vpop.xlane.xlu0 %1369
    %v1371 = vsel %vm194, %v1359, 0.0
    %1372 = vadd.xlane.f32.xlu0 %v1371
    %v1373 = vpop.xlane.xlu0 %1372
    %v1374 = vsel %vm194, %v1360, 0.0
    %1375 = vadd.xlane.f32.xlu0 %v1374
    %v1376 = vpop.xlane.xlu0 %1375
    %v1377 = vsel %vm194, %v1361, 0.0
    %1378 = vadd.xlane.f32.xlu0 %v1377
    %v1379 = vpop.xlane.xlu0 %1378
    %v1380 = vsel %vm194, %v1362, 0.0
    %1381 = vadd.xlane.f32.xlu0 %v1380
    %v1382 = vpop.xlane.xlu0 %1381
    %v1383 = vsel %vm194, %v1363, 0.0
    %1384 = vadd.xlane.f32.xlu0 %v1383
    %v1385 = vpop.xlane.xlu0 %1384
    %v1386 = vsel %vm194, %v1364, 0.0
    %1387 = vadd.xlane.f32.xlu0 %v1386
    %v1388 = vpop.xlane.xlu0 %1387
    %v1389 = vmax.f32 %v1196, %v1367
    %v1390 = vmax.f32 %v1197, %v1370
    %v1391 = vmax.f32 %v1198, %v1373
    %v1392 = vmax.f32 %v1199, %v1376
    %v1393 = vmax.f32 %v1200, %v1379
    %v1394 = vmax.f32 %v1201, %v1382
    %v1395 = vmax.f32 %v1202, %v1385
    %v1396 = vmax.f32 %v1203, %v1388
    %v1397 = vsub.f32 %v1196, %v1389
    %v1398 = vsub.f32 %v1197, %v1390
    %v1399 = vsub.f32 %v1198, %v1391
    %v1400 = vsub.f32 %v1199, %v1392
    %v1401 = vsub.f32 %v1200, %v1393
    %v1402 = vsub.f32 %v1201, %v1394
    %v1403 = vsub.f32 %v1202, %v1395
    %v1404 = vsub.f32 %v1203, %v1396
    %v1405 = vmul.f32 %v1397, 1.442695
    %v1406 = vpow.pop %v1405
    %v1407 = vmul.f32 %v1398, 1.442695
    %v1408 = vpow.pop %v1407
    %v1409 = vmul.f32 %v1399, 1.442695
    %v1410 = vpow.pop %v1409
    %v1411 = vmul.f32 %v1400, 1.442695
    %v1412 = vpow.pop %v1411
    %v1413 = vmul.f32 %v1401, 1.442695
    %v1414 = vpow.pop %v1413
    %v1415 = vmul.f32 %v1402, 1.442695
    %v1416 = vpow.pop %v1415
    %v1417 = vmul.f32 %v1403, 1.442695
    %v1418 = vpow.pop %v1417
    %v1419 = vmul.f32 %v1404, 1.442695
    %v1420 = vpow.pop %v1419
    %v1421 = vsub.f32 %v1367, %v1389
    %v1422 = vsub.f32 %v1370, %v1390
    %v1423 = vsub.f32 %v1373, %v1391
    %v1424 = vsub.f32 %v1376, %v1392
    %v1425 = vsub.f32 %v1379, %v1393
    %v1426 = vsub.f32 %v1382, %v1394
    %v1427 = vsub.f32 %v1385, %v1395
    %v1428 = vsub.f32 %v1388, %v1396
    %v1429 = vmul.f32 %v1421, 1.442695
    %v1430 = vpow.pop %v1429
    %v1431 = vmul.f32 %v1422, 1.442695
    %v1432 = vpow.pop %v1431
    %v1433 = vmul.f32 %v1423, 1.442695
    %v1434 = vpow.pop %v1433
    %v1435 = vmul.f32 %v1424, 1.442695
    %v1436 = vpow.pop %v1435
    %v1437 = vmul.f32 %v1425, 1.442695
    %v1438 = vpow.pop %v1437
    %v1439 = vmul.f32 %v1426, 1.442695
    %v1440 = vpow.pop %v1439
    %v1441 = vmul.f32 %v1427, 1.442695
    %v1442 = vpow.pop %v1441
    %v1443 = vmul.f32 %v1428, 1.442695
    %v1444 = vpow.pop %v1443
    %v1445 = vmul.f32 %v1406, %v1260
    %v1446 = vmul.f32 %v1408, %v1261
    %v1447 = vmul.f32 %v1410, %v1262
    %v1448 = vmul.f32 %v1412, %v1263
    %v1449 = vmul.f32 %v1414, %v1264
    %v1450 = vmul.f32 %v1416, %v1265
    %v1451 = vmul.f32 %v1418, %v1266
    %v1452 = vmul.f32 %v1420, %v1267
    %v1453 = vadd.f32 %v1445, %v1430
    %v1454 = vadd.f32 %v1446, %v1432
    %v1455 = vadd.f32 %v1447, %v1434
    %v1456 = vadd.f32 %v1448, %v1436
    %v1457 = vadd.f32 %v1449, %v1438
    %v1458 = vadd.f32 %v1450, %v1440
    %v1459 = vadd.f32 %v1451, %v1442
    %v1460 = vadd.f32 %v1452, %v1444
    %v1461 = vmul.f32 %v1406, %v1316
    %v1462 = vmul.f32 %v1408, %v1317
    %v1463 = vmul.f32 %v1410, %v1318
    %v1464 = vmul.f32 %v1412, %v1319
    %v1465 = vmul.f32 %v1414, %v1320
    %v1466 = vmul.f32 %v1416, %v1321
    %v1467 = vmul.f32 %v1418, %v1322
    %v1468 = vmul.f32 %v1420, %v1323
    %v1469 = vmul.f32 %v1430, %v1338
    %v1470 = vmul.f32 %v1432, %v1340
    %v1471 = vmul.f32 %v1434, %v1343
    %v1472 = vmul.f32 %v1436, %v1345
    %v1473 = vmul.f32 %v1438, %v1348
    %v1474 = vmul.f32 %v1440, %v1350
    %v1475 = vmul.f32 %v1442, %v1353
    %v1476 = vmul.f32 %v1444, %v1355
    %1485 = vrot.lane.b32.xlu0 %v1469, 32
    %v1486 = vpop.permute.xlu0 %1485
    %1487 = vrot.lane.b32.xlu0 %v1470, 32
    %v1488 = vpop.permute.xlu0 %1487
    %1489 = vrot.lane.b32.xlu0 %v1471, 32
    %v1490 = vpop.permute.xlu0 %1489
    %1491 = vrot.lane.b32.xlu0 %v1472, 32
    %v1492 = vpop.permute.xlu0 %1491
    %1493 = vrot.lane.b32.xlu0 %v1473, 32
    %v1494 = vpop.permute.xlu0 %1493
    %1495 = vrot.lane.b32.xlu0 %v1474, 32
    %v1496 = vpop.permute.xlu0 %1495
    %1497 = vrot.lane.b32.xlu0 %v1475, 32
    %v1498 = vpop.permute.xlu0 %1497
    %1499 = vrot.lane.b32.xlu0 %v1476, 32
    %v1500 = vpop.permute.xlu0 %1499
    %v1509 = vadd.f32 %v1461, %v1486
    %v1510 = vadd.f32 %v1462, %v1488
    %v1511 = vadd.f32 %v1463, %v1490
    %v1512 = vadd.f32 %v1464, %v1492
    %v1513 = vadd.f32 %v1465, %v1494
    %v1514 = vadd.f32 %v1466, %v1496
    %v1515 = vadd.f32 %v1467, %v1498
    %v1516 = vadd.f32 %v1468, %v1500
    %v1517 = vrcp.pop %v1453
    %v1518 = vrcp.pop %v1454
    %v1519 = vrcp.pop %v1455
    %v1520 = vrcp.pop %v1456
    %v1521 = vrcp.pop %v1457
    %v1522 = vrcp.pop %v1458
    %v1523 = vrcp.pop %v1459
    %v1524 = vrcp.pop %v1460
    %v1525 = vmul.f32 %v1509, %v1517
    %v1526 = vmul.f32 %v1510, %v1518
    %v1527 = vmul.f32 %v1511, %v1519
    %v1528 = vmul.f32 %v1512, %v1520
    %v1529 = vmul.f32 %v1513, %v1521
    %v1530 = vmul.f32 %v1514, %v1522
    %v1531 = vmul.f32 %v1515, %v1523
    %v1532 = vmul.f32 %v1516, %v1524
    %v1533 = vpack.c.bf16 %v1526, %v1525
    %v1534 = vpack.c.bf16 %v1528, %v1527
    %v1535 = vpack.c.bf16 %v1530, %v1529
    %v1536 = vpack.c.bf16 %v1532, %v1531
    %v1537 = vld [vmem:[#allocation4] sm:$0xf]
    %v1538 = vld [vmem:[#allocation4 + $0x4] sm:$0xf]
    %v1539 = vld [vmem:[#allocation4 + $0x8] sm:$0xf]
    %v1540 = vld [vmem:[#allocation4 + $0xc] sm:$0xf]
    %v1541 = vld [vmem:[%s8] sm:$0x1]
    %v1543 = vperm.slane %v1541, 0
    %1549 = vrot.lane.b32.xlu0 %v1533, 96
    %v1550 = vpop.permute.xlu0 %1549
    %1551 = vrot.lane.b32.xlu0 %v1534, 96
    %v1552 = vpop.permute.xlu0 %1551
    %1553 = vrot.lane.b32.xlu0 %v1535, 96
    %v1554 = vpop.permute.xlu0 %1553
    %1555 = vrot.lane.b32.xlu0 %v1536, 96
    %v1556 = vpop.permute.xlu0 %1555
    %v1561 = vunpack.c.l.b16 %v1537
    %v1562 = vunpack.c.l.b16 %v1538
    %v1563 = vunpack.c.l.b16 %v1539
    %v1564 = vunpack.c.l.b16 %v1540
    %v1565 = vpack.c.b16 %v1562, %v1561
    %v1566 = vpack.c.b16 %v1564, %v1563
    %v1570 = vsel %vm194, %v1550, 0
    %v1573 = vsel %vm194, %v1552, 0
    %v1576 = vsel %vm194, %v1554, 0
    %v1579 = vsel %vm194, %v1556, 0
    %1581 = vmatpush.bf16.msra.mxu0 0
    %1582 = vmatpush.bf16.msra.mxu0 0
    %1583 = vmatpush.bf16.msra.mxu0 0
    %1584 = vmatpush.bf16.msra.mxu0 0
    %1585 = vmatpush.bf16.msra.mxu0 0
    %1586 = vmatpush.bf16.msra.mxu0 0
    %1587 = vmatpush.bf16.msra.mxu0 %v1566
    %1588 = vmatpush.bf16.msra.mxu0 %v1565
    %1589 = vmatmul.bf16.gmra.mxu0 %v1570
    %v1590 = vpop.f32.mrf.mxu0
    %v1591 = vadd.f32 %v1543, %v1590
    %v1592 = vpop.f32.mrf.mxu0
    %v1593 = vadd.f32 %v1543, %v1592
    %1594 = vmatmul.bf16.gmra.mxu0 %v1573
    %v1595 = vpop.f32.mrf.mxu0
    %v1596 = vadd.f32 %v1543, %v1595
    %v1597 = vpop.f32.mrf.mxu0
    %v1598 = vadd.f32 %v1543, %v1597
    %1599 = vmatmul.bf16.gmra.mxu0 %v1576
    %v1600 = vpop.f32.mrf.mxu0
    %v1601 = vadd.f32 %v1543, %v1600
    %v1602 = vpop.f32.mrf.mxu0
    %v1603 = vadd.f32 %v1543, %v1602
    %1604 = vmatmul.bf16.gmra.mxu0 %v1579
    %v1605 = vpop.f32.mrf.mxu0
    %v1606 = vadd.f32 %v1543, %v1605
    %v1607 = vpop.f32.mrf.mxu0
    %v1608 = vadd.f32 %v1543, %v1607
    %1609 = vdwg.mxu0
    %v1610 = vpack.c.bf16 %v1591, %v1591
    %v1611 = vpack.c.bf16 %v1593, %v1593
    %v1612 = vpack.c.bf16 %v1596, %v1596
    %v1613 = vpack.c.bf16 %v1598, %v1598
    %v1614 = vpack.c.bf16 %v1601, %v1601
    %v1615 = vpack.c.bf16 %v1603, %v1603
    %v1616 = vpack.c.bf16 %v1606, %v1606
    %v1617 = vpack.c.bf16 %v1608, %v1608
    %v1626 = vunpack.c.l.b16 %v244
    %v1627 = vunpack.c.l.b16 %v245
    %v1628 = vunpack.c.l.b16 %v246
    %v1629 = vunpack.c.l.b16 %v247
    %v1630 = vunpack.c.l.b16 %v248
    %v1631 = vunpack.c.l.b16 %v249
    %v1632 = vunpack.c.l.b16 %v250
    %v1633 = vunpack.c.l.b16 %v251
    %v1634 = vpack.c.b16 %v1627, %v1626
    %v1635 = vpack.c.b16 %v1629, %v1628
    %v1636 = vpack.c.b16 %v1631, %v1630
    %v1637 = vpack.c.b16 %v1633, %v1632
    %v1646 = vunpack.c.l.b16 %v1610
    %v1647 = vunpack.c.l.b16 %v1611
    %v1648 = vunpack.c.l.b16 %v1612
    %v1649 = vunpack.c.l.b16 %v1613
    %v1650 = vunpack.c.l.b16 %v1614
    %v1651 = vunpack.c.l.b16 %v1615
    %v1652 = vunpack.c.l.b16 %v1616
    %v1653 = vunpack.c.l.b16 %v1617
    %v1654 = vpack.c.b16 %v1647, %v1646
    %v1655 = vpack.c.b16 %v1649, %v1648
    %v1656 = vpack.c.b16 %v1651, %v1650
    %v1657 = vpack.c.b16 %v1653, %v1652
    %1658 = vrot.lane.b32.xlu0 %v1654, 32
    %v1659 = vpop.permute.xlu0 %1658
    %1660 = vrot.lane.b32.xlu0 %v1655, 32
    %v1661 = vpop.permute.xlu0 %1660
    %1662 = vrot.lane.b32.xlu0 %v1656, 32
    %v1663 = vpop.permute.xlu0 %1662
    %1664 = vrot.lane.b32.xlu0 %v1657, 32
    %v1665 = vpop.permute.xlu0 %1664
    %v1668 = vsel %vm194, %v1634, %v1659
    %v1671 = vsel %vm194, %v1635, %v1661
    %v1674 = vsel %vm194, %v1636, %v1663
    %v1677 = vsel %vm194, %v1637, %v1665
    %v1678 = vld [vmem:[%s9] sm:$0xf]
    %v1679 = vld [vmem:[%s9 + $0x4] sm:$0xf]
    %v1680 = vld [vmem:[%s9 + $0x8] sm:$0xf]
    %v1681 = vld [vmem:[%s9 + $0xc] sm:$0xf]
    %v1682 = vld [vmem:[%s9 + $0x10] sm:$0xf]
    %v1683 = vld [vmem:[%s9 + $0x14] sm:$0xf]
    %v1684 = vld [vmem:[%s9 + $0x18] sm:$0xf]
    %v1685 = vld [vmem:[%s9 + $0x1c] sm:$0xf]
    %v1686 = vld [vmem:[%s10] sm:$0x1]
    %v1688 = vperm.slane %v1686, 0
    %v1698 = vunpack.c.l.b16 %v1678
    %v1699 = vunpack.c.l.b16 %v1679
    %v1700 = vunpack.c.l.b16 %v1680
    %v1701 = vunpack.c.l.b16 %v1681
    %v1702 = vunpack.c.l.b16 %v1682
    %v1703 = vunpack.c.l.b16 %v1683
    %v1704 = vunpack.c.l.b16 %v1684
    %v1705 = vunpack.c.l.b16 %v1685
    %v1706 = vpack.c.b16 %v1699, %v1698
    %v1707 = vpack.c.b16 %v1701, %v1700
    %v1708 = vpack.c.b16 %v1703, %v1702
    %v1709 = vpack.c.b16 %v1705, %v1704
    %v1714 = vsel %vm358, %v1668, 0
    %v1716 = vsel %vm358, %v1671, 0
    %v1718 = vsel %vm358, %v1674, 0
    %v1720 = vsel %vm358, %v1677, 0
    %1722 = vmatpush.bf16.msra.mxu0 0
    %1723 = vmatpush.bf16.msra.mxu0 0
    %1724 = vmatpush.bf16.msra.mxu0 0
    %1725 = vmatpush.bf16.msra.mxu0 0
    %1726 = vmatpush.bf16.msra.mxu0 %v1709
    %1727 = vmatpush.bf16.msra.mxu0 %v1708
    %1728 = vmatpush.bf16.msra.mxu0 %v1707
    %1729 = vmatpush.bf16.msra.mxu0 %v1706
    %1730 = vmatmul.bf16.gmra.mxu0 %v1714
    %v1731 = vpop.f32.mrf.mxu0
    %v1732 = vadd.f32 %v1688, %v1731
    %v1733 = vpop.f32.mrf.mxu0
    %v1734 = vadd.f32 %v1688, %v1733
    %1735 = vmatmul.bf16.gmra.mxu0 %v1716
    %v1736 = vpop.f32.mrf.mxu0
    %v1737 = vadd.f32 %v1688, %v1736
    %v1738 = vpop.f32.mrf.mxu0
    %v1739 = vadd.f32 %v1688, %v1738
    %1740 = vmatmul.bf16.gmra.mxu0 %v1718
    %v1741 = vpop.f32.mrf.mxu0
    %v1742 = vadd.f32 %v1688, %v1741
    %v1743 = vpop.f32.mrf.mxu0
    %v1744 = vadd.f32 %v1688, %v1743
    %1745 = vmatmul.bf16.gmra.mxu0 %v1720
    %v1746 = vpop.f32.mrf.mxu0
    %v1747 = vadd.f32 %v1688, %v1746
    %v1748 = vpop.f32.mrf.mxu0
    %v1749 = vadd.f32 %v1688, %v1748
    %1750 = vdwg.mxu0
    %1751 = vst [vmem:[%s11] sm:$0xff] %v1732
    %1752 = vst [vmem:[%s11 + $0x8] sm:$0xff] %v1734
    %1753 = vst [vmem:[%s11 + $0x10] sm:$0xff] %v1737
    %1754 = vst [vmem:[%s11 + $0x18] sm:$0xff] %v1739
    %1755 = vst [vmem:[%s11 + $0x20] sm:$0xff] %v1742
    %1756 = vst [vmem:[%s11 + $0x28] sm:$0xff] %v1744
    %1757 = vst [vmem:[%s11 + $0x30] sm:$0xff] %v1747
    %1758 = vst [vmem:[%s11 + $0x38] sm:$0xff] %v1749
    // Predicated region
    $region54: #{forward.1} parent=1 // pred_check
      _
    $region55: #{forward.1} parent=1 // pred_check_branch
      %1760 = sbr.rel (0) target = $region57
    $region56: #{forward.1} parent=1 // pred_region
      _
    $region57: #{forward.1} parent=1 // pred_fallthru
      _
    // Predicated region
    $region58: #{forward.1} parent=1 // pred_check
      _
    $region59: #{forward.1} parent=1 // pred_check_branch
      %1762 = sbr.rel (0) target = $region61
    $region60: #{forward.1} parent=1 // pred_region
      _
    $region61: #{forward.1} parent=1 // pred_fallthru
      _
    %1763 = vsyncpa [#allocation3], 1
    %1764 = vsyncpa [#allocation5], 1

</llo_original>
